<compile_context>
chip_gen: v6e
topology: v6e:2x2x1
jax: 0.10.0
libtpu: 0.0.40
codegen_flags: <defaults>
</compile_context>

<pallas_src>
import math

import jax
import jax.numpy as jnp
from jax.experimental import pallas as pl
from jax.experimental.pallas import tpu as pltpu


def _make_lstm_dms_kernel(n_lstm, n_mlp, hid_dim, seq_t):
    """Fused kernel: `n_lstm` stacked LSTM layers + `n_mlp` MLP layers."""
    H = hid_dim
    T = seq_t

    def kernel(*refs):
        pos = 0
        x_ref = refs[pos]; pos += 1                      # (T*Bb, in_dim), time-major rows
        w_ih0_ref, w_hh0_ref, b0_ref = refs[pos:pos + 3]
        pos += 3
        fused_refs = [(refs[pos + 2 * i], refs[pos + 2 * i + 1])
                      for i in range(n_lstm - 1)]
        pos += 2 * (n_lstm - 1)
        mlp_refs = [(refs[pos + 2 * i], refs[pos + 2 * i + 1])
                    for i in range(n_mlp)]
        pos += 2 * n_mlp
        o_ref = refs[pos]; pos += 1                      # (T*Bb, n_out)
        top_scr = refs[pos]                              # VMEM scratch (T*Bb, H)

        Bb = x_ref.shape[0] // T

        # ---- Hoist loop-invariant loads / broadcasts out of the unrolled loop
        #      (JAX does not CSE them across unrolled iterations).
        w_hh0 = w_hh0_ref[...]                           # (H, 4H)
        fused_w = [(w_ref[...],                          # (2H, 4H) = [w_ih; w_hh]
                    jnp.broadcast_to(b_ref[...], (Bb, 4 * H)))
                   for (w_ref, b_ref) in fused_refs]

        # ---- Layer-0 input projection hoisted OFF the serial recurrence path:
        #      one (T*Bb, in) @ (in, 4H) matmul + bias, off the critical chain.
        xw0 = (jnp.dot(x_ref[...], w_ih0_ref[...],
                       preferred_element_type=jnp.float32)
               + b0_ref[...])                            # (T*Bb, 4H)

        h = [jnp.zeros((Bb, H), jnp.float32) for _ in range(n_lstm)]
        c = [jnp.zeros((Bb, H), jnp.float32) for _ in range(n_lstm)]

        def lstm_cell(gates, c_prev):
            # Full-width sigmoid/tanh: 2 EUP issues instead of 4.  Slices are
            # taken afterwards: i/f/o lanes from the sigmoid, g lanes from the
            # tanh, so each gate gets the correct nonlinearity.
            sg = jax.nn.sigmoid(gates)
            tg = jnp.tanh(gates)
            i_g = sg[:, 0 * H:1 * H]
            f_g = sg[:, 1 * H:2 * H]
            g_g = tg[:, 2 * H:3 * H]
            o_g = sg[:, 3 * H:4 * H]
            c_new = f_g * c_prev + i_g * g_g
            h_new = o_g * jnp.tanh(c_new)
            return h_new, c_new

        # T is small & static -> unroll the recurrence (scheduler visibility).
        # TODO(synk): switch to lax.fori_loop with a small unroll factor for
        # large T so vreg live ranges / compile time stay bounded.
        for t in range(T):
            # Layer 0: only the recurrent matmul remains on the chain.
            gates0 = xw0[t * Bb:(t + 1) * Bb, :] + jnp.dot(
                h[0], w_hh0, preferred_element_type=jnp.float32)
            h[0], c[0] = lstm_cell(gates0, c[0])
            inp = h[0]
            # Stacked layers: one fused (Bb, 2H) @ (2H, 4H) matmul each.
            for l in range(1, n_lstm):
                w_f, b_f = fused_w[l - 1]
                gates = jnp.dot(jnp.concatenate([inp, h[l]], axis=1), w_f,
                                preferred_element_type=jnp.float32) + b_f
                h[l], c[l] = lstm_cell(gates, c[l])
                inp = h[l]
            # Stash top-layer h_t (off the recurrence chain); MLP is deferred.
            top_scr[t * Bb:(t + 1) * Bb, :] = inp

        # ---- Deferred SiLU-MLP head: matmuls on the whole (T*Bb, H) slab and
        #      a single dense (T*Bb, n_out) store.
        y = top_scr[...]
        for l, (w_ref, b_ref) in enumerate(mlp_refs):
            y = jnp.dot(y, w_ref[...],
                        preferred_element_type=jnp.float32) + b_ref[...]
            if l < n_mlp - 1:
                y = y * jax.nn.sigmoid(y)                # SiLU
        o_ref[...] = y.astype(o_ref.dtype)

    return kernel


class LSTM_DMS:
    """JAX/Pallas port of the PyTorch LSTM_DMS module (forward only)."""

    def __init__(self, in_dim, hid_dim, out_dim, seq_len, num_layers=2,
                 dms_mlp_num_layers=2, act_name="silu", key=None):
        assert act_name == "silu"  # TODO(synk): other activations not wired up
        self.in_dim = in_dim
        self.hid_dim = hid_dim
        self.out_dim = out_dim
        self.seq_len = seq_len
        self.num_layers = num_layers
        key = key if key is not None else jax.random.PRNGKey(0)

        # --- LSTM params, PyTorch init U(-1/sqrt(H), 1/sqrt(H)).
        # Stored pre-transposed ([in, 4H]); b = b_ih + b_hh, shape (1, 4H).
        self.lstm_params = []
        bound = 1.0 / math.sqrt(hid_dim)
        for layer in range(num_layers):
            in_sz = in_dim if layer == 0 else hid_dim
            key, k1, k2, k3, k4 = jax.random.split(key, 5)
            w_ih = jax.random.uniform(k1, (in_sz, 4 * hid_dim), jnp.float32,
                                      minval=-bound, maxval=bound)
            w_hh = jax.random.uniform(k2, (hid_dim, 4 * hid_dim), jnp.float32,
                                      minval=-bound, maxval=bound)
            b_ih = jax.random.uniform(k3, (4 * hid_dim,), jnp.float32,
                                      minval=-bound, maxval=bound)
            b_hh = jax.random.uniform(k4, (4 * hid_dim,), jnp.float32,
                                      minval=-bound, maxval=bound)
            self.lstm_params.append(
                (w_ih, w_hh, (b_ih + b_hh).reshape(1, 4 * hid_dim)))

        # Kernel-side packing: layer 0 keeps w_ih separate (its input
        # projection is hoisted out of the recurrence); layers >= 1 store the
        # fused [w_ih; w_hh] so the cell body is a single matmul.
        self.lstm_layer0 = self.lstm_params[0]
        self.lstm_fused = [
            (jnp.concatenate([w_ih, w_hh], axis=0), b)
            for (w_ih, w_hh, b) in self.lstm_params[1:]]

        # --- MLP(in=hid_dim, hid=hid_dim, out=seq_len*out_dim, n=dms_mlp_num_layers)
        mlp_out = seq_len * out_dim
        self.mlp_params = []
        for layer in range(dms_mlp_num_layers):
            fan_in = hid_dim
            out_ = mlp_out if layer == dms_mlp_num_layers - 1 else hid_dim
            b_ = 1.0 / math.sqrt(fan_in)
            key, kw, kb = jax.random.split(key, 3)
            w = jax.random.uniform(kw, (fan_in, out_), jnp.float32,
                                   minval=-b_, maxval=b_)
            b = jax.random.uniform(kb, (1, out_), jnp.float32,
                                   minval=-b_, maxval=b_)
            self.mlp_params.append((w, b))

    def __call__(self, x):
        """x: (batch, num_edges, in_dim) -> (batch, num_edges, seq_len*out_dim)."""
        B, T, _ = x.shape
        H = self.hid_dim
        n_out = self.mlp_params[-1][0].shape[1]

        # Batch-parallel grid axis: lets v7x's two TensorCores each take half
        # the batch.  Gated on batch size / alignment so tiny batches (and
        # 1-TC chips) keep the zero-overhead single-block path.
        n_chunks = 2 if (B % 2 == 0 and (B // 2) >= 16
                         and (B // 2) % 8 == 0) else 1
        Bb = B // n_chunks

        # Rows presented (chunk, t, b)-major: each grid step gets a contiguous
        # (T*Bb, .) slab that is time-major inside the chunk, so the kernel is
        # pure 2-D (static leading-dim slices only).  These wrapper-side
        # reshapes/transposes are ~KBs here (negligible vs. the recurrence).
        xf = x.astype(jnp.float32)
        x_rows = jnp.transpose(
            xf.reshape(n_chunks, Bb, T, self.in_dim), (0, 2, 1, 3)
        ).reshape(n_chunks * T * Bb, self.in_dim)

        flat_inputs = [x_rows]
        flat_inputs += list(self.lstm_layer0)            # w_ih0, w_hh0, b0
        for p in self.lstm_fused:                        # (W_fused, b) per layer >= 1
            flat_inputs += list(p)
        for p in self.mlp_params:                        # (w, b) per MLP layer
            flat_inputs += list(p)

        in_specs = [pl.BlockSpec((T * Bb, self.in_dim), lambda i: (i, 0))]
        # Weights/biases: whole array every grid step (grid-invariant).
        # TODO(synk): pl.Buffered(1) / bf16 storage for these when scaling
        # hid_dim toward the v7x 64 MiB VMEM budget.
        in_specs += [pl.BlockSpec(a.shape, lambda i: (0, 0))
                     for a in flat_inputs[1:]]

        kernel = _make_lstm_dms_kernel(
            n_lstm=self.num_layers, n_mlp=len(self.mlp_params),
            hid_dim=H, seq_t=T)

        out_rows = pl.pallas_call(
            kernel,
            out_shape=jax.ShapeDtypeStruct((n_chunks * T * Bb, n_out),
                                           jnp.float32),
            grid=(n_chunks,),
            in_specs=in_specs,
            out_specs=pl.BlockSpec((T * Bb, n_out), lambda i: (i, 0)),
            scratch_shapes=[pltpu.VMEM((T * Bb, H), jnp.float32)],
            compiler_params=pltpu.CompilerParams(
                dimension_semantics=("parallel",),
                vmem_limit_bytes=32 * 1024 * 1024),
        )(*flat_inputs)

        # Undo the (chunk, t, b) row ordering -> (batch, num_edges, n_out).
        out = jnp.transpose(
            out_rows.reshape(n_chunks, T, Bb, n_out), (0, 2, 1, 3)
        ).reshape(B, T, n_out)
        return out

    # Pure-JAX reference (mirrors torch.nn.LSTM(batch_first=True) + MLP).
    def reference(self, x):
        hp = jax.lax.Precision.HIGHEST
        B, T, _ = x.shape
        H = self.hid_dim
        h = [jnp.zeros((B, H), jnp.float32) for _ in range(self.num_layers)]
        c = [jnp.zeros((B, H), jnp.float32) for _ in range(self.num_layers)]
        tops = []
        for t in range(T):
            inp = x[:, t, :]
            for l, (w_ih, w_hh, bias) in enumerate(self.lstm_params):
                g = (jnp.dot(inp, w_ih, precision=hp)
                     + jnp.dot(h[l], w_hh, precision=hp) + bias)
                i_g = jax.nn.sigmoid(g[:, :H])
                f_g = jax.nn.sigmoid(g[:, H:2 * H])
                g_g = jnp.tanh(g[:, 2 * H:3 * H])
                o_g = jax.nn.sigmoid(g[:, 3 * H:])
                c[l] = f_g * c[l] + i_g * g_g
                h[l] = o_g * jnp.tanh(c[l])
                inp = h[l]
            tops.append(inp)
        y = jnp.stack(tops, axis=1)  # (B, T, H)
        for l, (w, bias) in enumerate(self.mlp_params):
            y = jnp.einsum("bth,hn->btn", y, w, precision=hp) + bias
            if l < len(self.mlp_params) - 1:
                y = y * jax.nn.sigmoid(y)
        return y


if __name__ == "__main__":
    key = jax.random.PRNGKey(0)
    kx, kp = jax.random.split(key)

    batch, num_edges = 2, 8                       # num_edges is the LSTM "sequence" axis
    in_dim, hid_dim, out_dim, seq_len = 4, 32, 16, 8   # seq_len*out_dim = 128 (lane dense)

    x = jax.random.normal(kx, (batch, num_edges, in_dim), jnp.float32)
    model = LSTM_DMS(in_dim, hid_dim, out_dim, seq_len,
                     num_layers=2, dms_mlp_num_layers=2, act_name="silu", key=kp)

    out = jax.block_until_ready(model(x))
    ref = model.reference(x)

    assert out.shape == (batch, num_edges, seq_len * out_dim), out.shape
    err = float(jnp.max(jnp.abs(out - ref)))
    assert jnp.allclose(out, ref, atol=1e-4, rtol=1e-4), f"max abs err {err}"
    print("KERNEL_OK")
</pallas_src>

<mosaic_0001>
module attributes {stable_mosaic.version = 11 : i64} {
  func.func @kernel(%arg0: i32, %arg1: memref<16x4xf32, #tpu.memory_space<vmem>>, %arg2: memref<4x128xf32, #tpu.memory_space<vmem>>, %arg3: memref<32x128xf32, #tpu.memory_space<vmem>>, %arg4: memref<1x128xf32, #tpu.memory_space<vmem>>, %arg5: memref<64x128xf32, #tpu.memory_space<vmem>>, %arg6: memref<1x128xf32, #tpu.memory_space<vmem>>, %arg7: memref<32x32xf32, #tpu.memory_space<vmem>>, %arg8: memref<1x32xf32, #tpu.memory_space<vmem>>, %arg9: memref<32x128xf32, #tpu.memory_space<vmem>>, %arg10: memref<1x128xf32, #tpu.memory_space<vmem>>, %arg11: memref<16x128xf32, #tpu.memory_space<vmem>>, %arg12: memref<16x32xf32, #tpu.memory_space<vmem>>) attributes {dimension_semantics = [#tpu.dimension_semantics<parallel>], iteration_bounds = array<i64: 1>, scalar_prefetch = 0 : i64, scratch_operands = 1 : i64, tpu.core_type = #tpu.core_type<tc>, window_params = [{transform_indices = @transform_0, window_bounds = array<i64: 16, 4>}, {pipeline_mode = #tpu.pipeline_mode<synchronous>, transform_indices = @transform_1, window_bounds = array<i64: 4, 128>}, {pipeline_mode = #tpu.pipeline_mode<synchronous>, transform_indices = @transform_2, window_bounds = array<i64: 32, 128>}, {pipeline_mode = #tpu.pipeline_mode<synchronous>, transform_indices = @transform_3, window_bounds = array<i64: 1, 128>}, {pipeline_mode = #tpu.pipeline_mode<synchronous>, transform_indices = @transform_4, window_bounds = array<i64: 64, 128>}, {pipeline_mode = #tpu.pipeline_mode<synchronous>, transform_indices = @transform_5, window_bounds = array<i64: 1, 128>}, {pipeline_mode = #tpu.pipeline_mode<synchronous>, transform_indices = @transform_6, window_bounds = array<i64: 32, 32>}, {pipeline_mode = #tpu.pipeline_mode<synchronous>, transform_indices = @transform_7, window_bounds = array<i64: 1, 32>}, {pipeline_mode = #tpu.pipeline_mode<synchronous>, transform_indices = @transform_8, window_bounds = array<i64: 32, 128>}, {pipeline_mode = #tpu.pipeline_mode<synchronous>, transform_indices = @transform_9, window_bounds = array<i64: 1, 128>}, {transform_indices = @transform_10, window_bounds = array<i64: 16, 128>}]} {
    %c0 = arith.constant 0 : index
    %c0_0 = arith.constant 0 : index
    %0 = vector.load %arg3[%c0, %c0_0] : memref<32x128xf32, #tpu.memory_space<vmem>>, vector<32x128xf32>
    %c0_1 = arith.constant 0 : index
    %c0_2 = arith.constant 0 : index
    %1 = vector.load %arg5[%c0_1, %c0_2] : memref<64x128xf32, #tpu.memory_space<vmem>>, vector<64x128xf32>
    %c0_3 = arith.constant 0 : index
    %c0_4 = arith.constant 0 : index
    %2 = vector.load %arg6[%c0_3, %c0_4] : memref<1x128xf32, #tpu.memory_space<vmem>>, vector<1x128xf32>
    %3 = vector.shape_cast %2 : vector<1x128xf32> to vector<1x128xf32>
    %4 = vector.broadcast %3 : vector<1x128xf32> to vector<2x128xf32>
    %c0_5 = arith.constant 0 : index
    %c0_6 = arith.constant 0 : index
    %5 = vector.load %arg1[%c0_5, %c0_6] : memref<16x4xf32, #tpu.memory_space<vmem>>, vector<16x4xf32>
    %c0_7 = arith.constant 0 : index
    %c0_8 = arith.constant 0 : index
    %6 = vector.load %arg2[%c0_7, %c0_8] : memref<4x128xf32, #tpu.memory_space<vmem>>, vector<4x128xf32>
    %cst = arith.constant dense<0.000000e+00> : vector<16x128xf32>
    %7 = tpu.matmul %5, %6, %cst {dimension_numbers = #tpu.dot_dimension_numbers<[1], [0], [0], [1], [0, 0, 1, 1], [], []>} : vector<16x4xf32>, vector<4x128xf32>, vector<16x128xf32> -> vector<16x128xf32>
    %c0_9 = arith.constant 0 : index
    %c0_10 = arith.constant 0 : index
    %8 = vector.load %arg4[%c0_9, %c0_10] : memref<1x128xf32, #tpu.memory_space<vmem>>, vector<1x128xf32>
    %9 = vector.broadcast %8 : vector<1x128xf32> to vector<16x128xf32>
    %10 = arith.addf %7, %9 : vector<16x128xf32>
    %cst_11 = arith.constant 0.000000e+00 : f32
    %11 = vector.broadcast %cst_11 : f32 to vector<2x32xf32>
    %cst_12 = arith.constant 0.000000e+00 : f32
    %12 = vector.broadcast %cst_12 : f32 to vector<2x32xf32>
    %cst_13 = arith.constant 0.000000e+00 : f32
    %13 = vector.broadcast %cst_13 : f32 to vector<2x32xf32>
    %cst_14 = arith.constant 0.000000e+00 : f32
    %14 = vector.broadcast %cst_14 : f32 to vector<2x32xf32>
    %15 = vector.extract_strided_slice %10 {offsets = [0, 0], sizes = [2, 128], strides = [1, 1]} : vector<16x128xf32> to vector<2x128xf32>
    %cst_15 = arith.constant dense<0.000000e+00> : vector<2x128xf32>
    %16 = tpu.matmul %11, %0, %cst_15 {dimension_numbers = #tpu.dot_dimension_numbers<[1], [0], [0], [1], [0, 0, 1, 1], [], []>} : vector<2x32xf32>, vector<32x128xf32>, vector<2x128xf32> -> vector<2x128xf32>
    %17 = arith.addf %15, %16 : vector<2x128xf32>
    %18 = arith.negf %17 : vector<2x128xf32>
    %19 = math.exp %18 : vector<2x128xf32>
    %cst_16 = arith.constant 1.000000e+00 : f32
    %20 = vector.broadcast %cst_16 : f32 to vector<2x128xf32>
    %21 = arith.addf %20, %19 : vector<2x128xf32>
    %22 = arith.divf %20, %21 : vector<2x128xf32>
    %23 = math.tanh %17 : vector<2x128xf32>
    %24 = vector.extract_strided_slice %22 {offsets = [0, 0], sizes = [2, 32], strides = [1, 1]} : vector<2x128xf32> to vector<2x32xf32>
    %25 = vector.extract_strided_slice %22 {offsets = [0, 32], sizes = [2, 32], strides = [1, 1]} : vector<2x128xf32> to vector<2x32xf32>
    %26 = vector.extract_strided_slice %23 {offsets = [0, 64], sizes = [2, 32], strides = [1, 1]} : vector<2x128xf32> to vector<2x32xf32>
    %27 = vector.extract_strided_slice %22 {offsets = [0, 96], sizes = [2, 32], strides = [1, 1]} : vector<2x128xf32> to vector<2x32xf32>
    %28 = arith.mulf %25, %13 : vector<2x32xf32>
    %29 = arith.mulf %24, %26 : vector<2x32xf32>
    %30 = arith.addf %28, %29 : vector<2x32xf32>
    %31 = math.tanh %30 : vector<2x32xf32>
    %32 = arith.mulf %27, %31 : vector<2x32xf32>
    %33 = tpu.concatenate %32, %12 in 1 : vector<2x32xf32>, vector<2x32xf32> -> vector<2x64xf32>
    %cst_17 = arith.constant dense<0.000000e+00> : vector<2x128xf32>
    %34 = tpu.matmul %33, %1, %cst_17 {dimension_numbers = #tpu.dot_dimension_numbers<[1], [0], [0], [1], [0, 0, 1, 1], [], []>} : vector<2x64xf32>, vector<64x128xf32>, vector<2x128xf32> -> vector<2x128xf32>
    %35 = arith.addf %34, %4 : vector<2x128xf32>
    %36 = arith.negf %35 : vector<2x128xf32>
    %37 = math.exp %36 : vector<2x128xf32>
    %cst_18 = arith.constant 1.000000e+00 : f32
    %38 = vector.broadcast %cst_18 : f32 to vector<2x128xf32>
    %39 = arith.addf %38, %37 : vector<2x128xf32>
    %40 = arith.divf %38, %39 : vector<2x128xf32>
    %41 = math.tanh %35 : vector<2x128xf32>
    %42 = vector.extract_strided_slice %40 {offsets = [0, 0], sizes = [2, 32], strides = [1, 1]} : vector<2x128xf32> to vector<2x32xf32>
    %43 = vector.extract_strided_slice %40 {offsets = [0, 32], sizes = [2, 32], strides = [1, 1]} : vector<2x128xf32> to vector<2x32xf32>
    %44 = vector.extract_strided_slice %41 {offsets = [0, 64], sizes = [2, 32], strides = [1, 1]} : vector<2x128xf32> to vector<2x32xf32>
    %45 = vector.extract_strided_slice %40 {offsets = [0, 96], sizes = [2, 32], strides = [1, 1]} : vector<2x128xf32> to vector<2x32xf32>
    %46 = arith.mulf %43, %14 : vector<2x32xf32>
    %47 = arith.mulf %42, %44 : vector<2x32xf32>
    %48 = arith.addf %46, %47 : vector<2x32xf32>
    %49 = math.tanh %48 : vector<2x32xf32>
    %50 = arith.mulf %45, %49 : vector<2x32xf32>
    %c0_19 = arith.constant 0 : index
    %c0_20 = arith.constant 0 : index
    %51 = vector.load %arg12[%c0_19, %c0_20] : memref<16x32xf32, #tpu.memory_space<vmem>>, vector<2x32xf32>
    tpu.vector_store %arg12[%c0_19, %c0_20], %50 {strides = array<i32>} : memref<16x32xf32, #tpu.memory_space<vmem>>, vector<2x32xf32>,
    %52 = vector.extract_strided_slice %10 {offsets = [2, 0], sizes = [2, 128], strides = [1, 1]} : vector<16x128xf32> to vector<2x128xf32>
    %cst_21 = arith.constant dense<0.000000e+00> : vector<2x128xf32>
    %53 = tpu.matmul %32, %0, %cst_21 {dimension_numbers = #tpu.dot_dimension_numbers<[1], [0], [0], [1], [0, 0, 1, 1], [], []>} : vector<2x32xf32>, vector<32x128xf32>, vector<2x128xf32> -> vector<2x128xf32>
    %54 = arith.addf %52, %53 : vector<2x128xf32>
    %55 = arith.negf %54 : vector<2x128xf32>
    %56 = math.exp %55 : vector<2x128xf32>
    %cst_22 = arith.constant 1.000000e+00 : f32
    %57 = vector.broadcast %cst_22 : f32 to vector<2x128xf32>
    %58 = arith.addf %57, %56 : vector<2x128xf32>
    %59 = arith.divf %57, %58 : vector<2x128xf32>
    %60 = math.tanh %54 : vector<2x128xf32>
    %61 = vector.extract_strided_slice %59 {offsets = [0, 0], sizes = [2, 32], strides = [1, 1]} : vector<2x128xf32> to vector<2x32xf32>
    %62 = vector.extract_strided_slice %59 {offsets = [0, 32], sizes = [2, 32], strides = [1, 1]} : vector<2x128xf32> to vector<2x32xf32>
    %63 = vector.extract_strided_slice %60 {offsets = [0, 64], sizes = [2, 32], strides = [1, 1]} : vector<2x128xf32> to vector<2x32xf32>
    %64 = vector.extract_strided_slice %59 {offsets = [0, 96], sizes = [2, 32], strides = [1, 1]} : vector<2x128xf32> to vector<2x32xf32>
    %65 = arith.mulf %62, %30 : vector<2x32xf32>
    %66 = arith.mulf %61, %63 : vector<2x32xf32>
    %67 = arith.addf %65, %66 : vector<2x32xf32>
    %68 = math.tanh %67 : vector<2x32xf32>
    %69 = arith.mulf %64, %68 : vector<2x32xf32>
    %70 = tpu.concatenate %69, %50 in 1 : vector<2x32xf32>, vector<2x32xf32> -> vector<2x64xf32>
    %cst_23 = arith.constant dense<0.000000e+00> : vector<2x128xf32>
    %71 = tpu.matmul %70, %1, %cst_23 {dimension_numbers = #tpu.dot_dimension_numbers<[1], [0], [0], [1], [0, 0, 1, 1], [], []>} : vector<2x64xf32>, vector<64x128xf32>, vector<2x128xf32> -> vector<2x128xf32>
    %72 = arith.addf %71, %4 : vector<2x128xf32>
    %73 = arith.negf %72 : vector<2x128xf32>
    %74 = math.exp %73 : vector<2x128xf32>
    %cst_24 = arith.constant 1.000000e+00 : f32
    %75 = vector.broadcast %cst_24 : f32 to vector<2x128xf32>
    %76 = arith.addf %75, %74 : vector<2x128xf32>
    %77 = arith.divf %75, %76 : vector<2x128xf32>
    %78 = math.tanh %72 : vector<2x128xf32>
    %79 = vector.extract_strided_slice %77 {offsets = [0, 0], sizes = [2, 32], strides = [1, 1]} : vector<2x128xf32> to vector<2x32xf32>
    %80 = vector.extract_strided_slice %77 {offsets = [0, 32], sizes = [2, 32], strides = [1, 1]} : vector<2x128xf32> to vector<2x32xf32>
    %81 = vector.extract_strided_slice %78 {offsets = [0, 64], sizes = [2, 32], strides = [1, 1]} : vector<2x128xf32> to vector<2x32xf32>
    %82 = vector.extract_strided_slice %77 {offsets = [0, 96], sizes = [2, 32], strides = [1, 1]} : vector<2x128xf32> to vector<2x32xf32>
    %83 = arith.mulf %80, %48 : vector<2x32xf32>
    %84 = arith.mulf %79, %81 : vector<2x32xf32>
    %85 = arith.addf %83, %84 : vector<2x32xf32>
    %86 = math.tanh %85 : vector<2x32xf32>
    %87 = arith.mulf %82, %86 : vector<2x32xf32>
    %c2 = arith.constant 2 : index
    %c0_25 = arith.constant 0 : index
    %88 = vector.load %arg12[%c2, %c0_25] : memref<16x32xf32, #tpu.memory_space<vmem>>, vector<2x32xf32>
    tpu.vector_store %arg12[%c2, %c0_25], %87 {strides = array<i32>} : memref<16x32xf32, #tpu.memory_space<vmem>>, vector<2x32xf32>,
    %89 = vector.extract_strided_slice %10 {offsets = [4, 0], sizes = [2, 128], strides = [1, 1]} : vector<16x128xf32> to vector<2x128xf32>
    %cst_26 = arith.constant dense<0.000000e+00> : vector<2x128xf32>
    %90 = tpu.matmul %69, %0, %cst_26 {dimension_numbers = #tpu.dot_dimension_numbers<[1], [0], [0], [1], [0, 0, 1, 1], [], []>} : vector<2x32xf32>, vector<32x128xf32>, vector<2x128xf32> -> vector<2x128xf32>
    %91 = arith.addf %89, %90 : vector<2x128xf32>
    %92 = arith.negf %91 : vector<2x128xf32>
    %93 = math.exp %92 : vector<2x128xf32>
    %cst_27 = arith.constant 1.000000e+00 : f32
    %94 = vector.broadcast %cst_27 : f32 to vector<2x128xf32>
    %95 = arith.addf %94, %93 : vector<2x128xf32>
    %96 = arith.divf %94, %95 : vector<2x128xf32>
    %97 = math.tanh %91 : vector<2x128xf32>
    %98 = vector.extract_strided_slice %96 {offsets = [0, 0], sizes = [2, 32], strides = [1, 1]} : vector<2x128xf32> to vector<2x32xf32>
    %99 = vector.extract_strided_slice %96 {offsets = [0, 32], sizes = [2, 32], strides = [1, 1]} : vector<2x128xf32> to vector<2x32xf32>
    %100 = vector.extract_strided_slice %97 {offsets = [0, 64], sizes = [2, 32], strides = [1, 1]} : vector<2x128xf32> to vector<2x32xf32>
    %101 = vector.extract_strided_slice %96 {offsets = [0, 96], sizes = [2, 32], strides = [1, 1]} : vector<2x128xf32> to vector<2x32xf32>
    %102 = arith.mulf %99, %67 : vector<2x32xf32>
    %103 = arith.mulf %98, %100 : vector<2x32xf32>
    %104 = arith.addf %102, %103 : vector<2x32xf32>
    %105 = math.tanh %104 : vector<2x32xf32>
    %106 = arith.mulf %101, %105 : vector<2x32xf32>
    %107 = tpu.concatenate %106, %87 in 1 : vector<2x32xf32>, vector<2x32xf32> -> vector<2x64xf32>
    %cst_28 = arith.constant dense<0.000000e+00> : vector<2x128xf32>
    %108 = tpu.matmul %107, %1, %cst_28 {dimension_numbers = #tpu.dot_dimension_numbers<[1], [0], [0], [1], [0, 0, 1, 1], [], []>} : vector<2x64xf32>, vector<64x128xf32>, vector<2x128xf32> -> vector<2x128xf32>
    %109 = arith.addf %108, %4 : vector<2x128xf32>
    %110 = arith.negf %109 : vector<2x128xf32>
    %111 = math.exp %110 : vector<2x128xf32>
    %cst_29 = arith.constant 1.000000e+00 : f32
    %112 = vector.broadcast %cst_29 : f32 to vector<2x128xf32>
    %113 = arith.addf %112, %111 : vector<2x128xf32>
    %114 = arith.divf %112, %113 : vector<2x128xf32>
    %115 = math.tanh %109 : vector<2x128xf32>
    %116 = vector.extract_strided_slice %114 {offsets = [0, 0], sizes = [2, 32], strides = [1, 1]} : vector<2x128xf32> to vector<2x32xf32>
    %117 = vector.extract_strided_slice %114 {offsets = [0, 32], sizes = [2, 32], strides = [1, 1]} : vector<2x128xf32> to vector<2x32xf32>
    %118 = vector.extract_strided_slice %115 {offsets = [0, 64], sizes = [2, 32], strides = [1, 1]} : vector<2x128xf32> to vector<2x32xf32>
    %119 = vector.extract_strided_slice %114 {offsets = [0, 96], sizes = [2, 32], strides = [1, 1]} : vector<2x128xf32> to vector<2x32xf32>
    %120 = arith.mulf %117, %85 : vector<2x32xf32>
    %121 = arith.mulf %116, %118 : vector<2x32xf32>
    %122 = arith.addf %120, %121 : vector<2x32xf32>
    %123 = math.tanh %122 : vector<2x32xf32>
    %124 = arith.mulf %119, %123 : vector<2x32xf32>
    %c4 = arith.constant 4 : index
    %c0_30 = arith.constant 0 : index
    %125 = vector.load %arg12[%c4, %c0_30] : memref<16x32xf32, #tpu.memory_space<vmem>>, vector<2x32xf32>
    tpu.vector_store %arg12[%c4, %c0_30], %124 {strides = array<i32>} : memref<16x32xf32, #tpu.memory_space<vmem>>, vector<2x32xf32>,
    %126 = vector.extract_strided_slice %10 {offsets = [6, 0], sizes = [2, 128], strides = [1, 1]} : vector<16x128xf32> to vector<2x128xf32>
    %cst_31 = arith.constant dense<0.000000e+00> : vector<2x128xf32>
    %127 = tpu.matmul %106, %0, %cst_31 {dimension_numbers = #tpu.dot_dimension_numbers<[1], [0], [0], [1], [0, 0, 1, 1], [], []>} : vector<2x32xf32>, vector<32x128xf32>, vector<2x128xf32> -> vector<2x128xf32>
    %128 = arith.addf %126, %127 : vector<2x128xf32>
    %129 = arith.negf %128 : vector<2x128xf32>
    %130 = math.exp %129 : vector<2x128xf32>
    %cst_32 = arith.constant 1.000000e+00 : f32
    %131 = vector.broadcast %cst_32 : f32 to vector<2x128xf32>
    %132 = arith.addf %131, %130 : vector<2x128xf32>
    %133 = arith.divf %131, %132 : vector<2x128xf32>
    %134 = math.tanh %128 : vector<2x128xf32>
    %135 = vector.extract_strided_slice %133 {offsets = [0, 0], sizes = [2, 32], strides = [1, 1]} : vector<2x128xf32> to vector<2x32xf32>
    %136 = vector.extract_strided_slice %133 {offsets = [0, 32], sizes = [2, 32], strides = [1, 1]} : vector<2x128xf32> to vector<2x32xf32>
    %137 = vector.extract_strided_slice %134 {offsets = [0, 64], sizes = [2, 32], strides = [1, 1]} : vector<2x128xf32> to vector<2x32xf32>
    %138 = vector.extract_strided_slice %133 {offsets = [0, 96], sizes = [2, 32], strides = [1, 1]} : vector<2x128xf32> to vector<2x32xf32>
    %139 = arith.mulf %136, %104 : vector<2x32xf32>
    %140 = arith.mulf %135, %137 : vector<2x32xf32>
    %141 = arith.addf %139, %140 : vector<2x32xf32>
    %142 = math.tanh %141 : vector<2x32xf32>
    %143 = arith.mulf %138, %142 : vector<2x32xf32>
    %144 = tpu.concatenate %143, %124 in 1 : vector<2x32xf32>, vector<2x32xf32> -> vector<2x64xf32>
    %cst_33 = arith.constant dense<0.000000e+00> : vector<2x128xf32>
    %145 = tpu.matmul %144, %1, %cst_33 {dimension_numbers = #tpu.dot_dimension_numbers<[1], [0], [0], [1], [0, 0, 1, 1], [], []>} : vector<2x64xf32>, vector<64x128xf32>, vector<2x128xf32> -> vector<2x128xf32>
    %146 = arith.addf %145, %4 : vector<2x128xf32>
    %147 = arith.negf %146 : vector<2x128xf32>
    %148 = math.exp %147 : vector<2x128xf32>
    %cst_34 = arith.constant 1.000000e+00 : f32
    %149 = vector.broadcast %cst_34 : f32 to vector<2x128xf32>
    %150 = arith.addf %149, %148 : vector<2x128xf32>
    %151 = arith.divf %149, %150 : vector<2x128xf32>
    %152 = math.tanh %146 : vector<2x128xf32>
    %153 = vector.extract_strided_slice %151 {offsets = [0, 0], sizes = [2, 32], strides = [1, 1]} : vector<2x128xf32> to vector<2x32xf32>
    %154 = vector.extract_strided_slice %151 {offsets = [0, 32], sizes = [2, 32], strides = [1, 1]} : vector<2x128xf32> to vector<2x32xf32>
    %155 = vector.extract_strided_slice %152 {offsets = [0, 64], sizes = [2, 32], strides = [1, 1]} : vector<2x128xf32> to vector<2x32xf32>
    %156 = vector.extract_strided_slice %151 {offsets = [0, 96], sizes = [2, 32], strides = [1, 1]} : vector<2x128xf32> to vector<2x32xf32>
    %157 = arith.mulf %154, %122 : vector<2x32xf32>
    %158 = arith.mulf %153, %155 : vector<2x32xf32>
    %159 = arith.addf %157, %158 : vector<2x32xf32>
    %160 = math.tanh %159 : vector<2x32xf32>
    %161 = arith.mulf %156, %160 : vector<2x32xf32>
    %c6 = arith.constant 6 : index
    %c0_35 = arith.constant 0 : index
    %162 = vector.load %arg12[%c6, %c0_35] : memref<16x32xf32, #tpu.memory_space<vmem>>, vector<2x32xf32>
    tpu.vector_store %arg12[%c6, %c0_35], %161 {strides = array<i32>} : memref<16x32xf32, #tpu.memory_space<vmem>>, vector<2x32xf32>,
    %163 = vector.extract_strided_slice %10 {offsets = [8, 0], sizes = [2, 128], strides = [1, 1]} : vector<16x128xf32> to vector<2x128xf32>
    %cst_36 = arith.constant dense<0.000000e+00> : vector<2x128xf32>
    %164 = tpu.matmul %143, %0, %cst_36 {dimension_numbers = #tpu.dot_dimension_numbers<[1], [0], [0], [1], [0, 0, 1, 1], [], []>} : vector<2x32xf32>, vector<32x128xf32>, vector<2x128xf32> -> vector<2x128xf32>
    %165 = arith.addf %163, %164 : vector<2x128xf32>
    %166 = arith.negf %165 : vector<2x128xf32>
    %167 = math.exp %166 : vector<2x128xf32>
    %cst_37 = arith.constant 1.000000e+00 : f32
    %168 = vector.broadcast %cst_37 : f32 to vector<2x128xf32>
    %169 = arith.addf %168, %167 : vector<2x128xf32>
    %170 = arith.divf %168, %169 : vector<2x128xf32>
    %171 = math.tanh %165 : vector<2x128xf32>
    %172 = vector.extract_strided_slice %170 {offsets = [0, 0], sizes = [2, 32], strides = [1, 1]} : vector<2x128xf32> to vector<2x32xf32>
    %173 = vector.extract_strided_slice %170 {offsets = [0, 32], sizes = [2, 32], strides = [1, 1]} : vector<2x128xf32> to vector<2x32xf32>
    %174 = vector.extract_strided_slice %171 {offsets = [0, 64], sizes = [2, 32], strides = [1, 1]} : vector<2x128xf32> to vector<2x32xf32>
    %175 = vector.extract_strided_slice %170 {offsets = [0, 96], sizes = [2, 32], strides = [1, 1]} : vector<2x128xf32> to vector<2x32xf32>
    %176 = arith.mulf %173, %141 : vector<2x32xf32>
    %177 = arith.mulf %172, %174 : vector<2x32xf32>
    %178 = arith.addf %176, %177 : vector<2x32xf32>
    %179 = math.tanh %178 : vector<2x32xf32>
    %180 = arith.mulf %175, %179 : vector<2x32xf32>
    %181 = tpu.concatenate %180, %161 in 1 : vector<2x32xf32>, vector<2x32xf32> -> vector<2x64xf32>
    %cst_38 = arith.constant dense<0.000000e+00> : vector<2x128xf32>
    %182 = tpu.matmul %181, %1, %cst_38 {dimension_numbers = #tpu.dot_dimension_numbers<[1], [0], [0], [1], [0, 0, 1, 1], [], []>} : vector<2x64xf32>, vector<64x128xf32>, vector<2x128xf32> -> vector<2x128xf32>
    %183 = arith.addf %182, %4 : vector<2x128xf32>
    %184 = arith.negf %183 : vector<2x128xf32>
    %185 = math.exp %184 : vector<2x128xf32>
    %cst_39 = arith.constant 1.000000e+00 : f32
    %186 = vector.broadcast %cst_39 : f32 to vector<2x128xf32>
    %187 = arith.addf %186, %185 : vector<2x128xf32>
    %188 = arith.divf %186, %187 : vector<2x128xf32>
    %189 = math.tanh %183 : vector<2x128xf32>
    %190 = vector.extract_strided_slice %188 {offsets = [0, 0], sizes = [2, 32], strides = [1, 1]} : vector<2x128xf32> to vector<2x32xf32>
    %191 = vector.extract_strided_slice %188 {offsets = [0, 32], sizes = [2, 32], strides = [1, 1]} : vector<2x128xf32> to vector<2x32xf32>
    %192 = vector.extract_strided_slice %189 {offsets = [0, 64], sizes = [2, 32], strides = [1, 1]} : vector<2x128xf32> to vector<2x32xf32>
    %193 = vector.extract_strided_slice %188 {offsets = [0, 96], sizes = [2, 32], strides = [1, 1]} : vector<2x128xf32> to vector<2x32xf32>
    %194 = arith.mulf %191, %159 : vector<2x32xf32>
    %195 = arith.mulf %190, %192 : vector<2x32xf32>
    %196 = arith.addf %194, %195 : vector<2x32xf32>
    %197 = math.tanh %196 : vector<2x32xf32>
    %198 = arith.mulf %193, %197 : vector<2x32xf32>
    %c8 = arith.constant 8 : index
    %c0_40 = arith.constant 0 : index
    %199 = vector.load %arg12[%c8, %c0_40] : memref<16x32xf32, #tpu.memory_space<vmem>>, vector<2x32xf32>
    tpu.vector_store %arg12[%c8, %c0_40], %198 {strides = array<i32>} : memref<16x32xf32, #tpu.memory_space<vmem>>, vector<2x32xf32>,
    %200 = vector.extract_strided_slice %10 {offsets = [10, 0], sizes = [2, 128], strides = [1, 1]} : vector<16x128xf32> to vector<2x128xf32>
    %cst_41 = arith.constant dense<0.000000e+00> : vector<2x128xf32>
    %201 = tpu.matmul %180, %0, %cst_41 {dimension_numbers = #tpu.dot_dimension_numbers<[1], [0], [0], [1], [0, 0, 1, 1], [], []>} : vector<2x32xf32>, vector<32x128xf32>, vector<2x128xf32> -> vector<2x128xf32>
    %202 = arith.addf %200, %201 : vector<2x128xf32>
    %203 = arith.negf %202 : vector<2x128xf32>
    %204 = math.exp %203 : vector<2x128xf32>
    %cst_42 = arith.constant 1.000000e+00 : f32
    %205 = vector.broadcast %cst_42 : f32 to vector<2x128xf32>
    %206 = arith.addf %205, %204 : vector<2x128xf32>
    %207 = arith.divf %205, %206 : vector<2x128xf32>
    %208 = math.tanh %202 : vector<2x128xf32>
    %209 = vector.extract_strided_slice %207 {offsets = [0, 0], sizes = [2, 32], strides = [1, 1]} : vector<2x128xf32> to vector<2x32xf32>
    %210 = vector.extract_strided_slice %207 {offsets = [0, 32], sizes = [2, 32], strides = [1, 1]} : vector<2x128xf32> to vector<2x32xf32>
    %211 = vector.extract_strided_slice %208 {offsets = [0, 64], sizes = [2, 32], strides = [1, 1]} : vector<2x128xf32> to vector<2x32xf32>
    %212 = vector.extract_strided_slice %207 {offsets = [0, 96], sizes = [2, 32], strides = [1, 1]} : vector<2x128xf32> to vector<2x32xf32>
    %213 = arith.mulf %210, %178 : vector<2x32xf32>
    %214 = arith.mulf %209, %211 : vector<2x32xf32>
    %215 = arith.addf %213, %214 : vector<2x32xf32>
    %216 = math.tanh %215 : vector<2x32xf32>
    %217 = arith.mulf %212, %216 : vector<2x32xf32>
    %218 = tpu.concatenate %217, %198 in 1 : vector<2x32xf32>, vector<2x32xf32> -> vector<2x64xf32>
    %cst_43 = arith.constant dense<0.000000e+00> : vector<2x128xf32>
    %219 = tpu.matmul %218, %1, %cst_43 {dimension_numbers = #tpu.dot_dimension_numbers<[1], [0], [0], [1], [0, 0, 1, 1], [], []>} : vector<2x64xf32>, vector<64x128xf32>, vector<2x128xf32> -> vector<2x128xf32>
    %220 = arith.addf %219, %4 : vector<2x128xf32>
    %221 = arith.negf %220 : vector<2x128xf32>
    %222 = math.exp %221 : vector<2x128xf32>
    %cst_44 = arith.constant 1.000000e+00 : f32
    %223 = vector.broadcast %cst_44 : f32 to vector<2x128xf32>
    %224 = arith.addf %223, %222 : vector<2x128xf32>
    %225 = arith.divf %223, %224 : vector<2x128xf32>
    %226 = math.tanh %220 : vector<2x128xf32>
    %227 = vector.extract_strided_slice %225 {offsets = [0, 0], sizes = [2, 32], strides = [1, 1]} : vector<2x128xf32> to vector<2x32xf32>
    %228 = vector.extract_strided_slice %225 {offsets = [0, 32], sizes = [2, 32], strides = [1, 1]} : vector<2x128xf32> to vector<2x32xf32>
    %229 = vector.extract_strided_slice %226 {offsets = [0, 64], sizes = [2, 32], strides = [1, 1]} : vector<2x128xf32> to vector<2x32xf32>
    %230 = vector.extract_strided_slice %225 {offsets = [0, 96], sizes = [2, 32], strides = [1, 1]} : vector<2x128xf32> to vector<2x32xf32>
    %231 = arith.mulf %228, %196 : vector<2x32xf32>
    %232 = arith.mulf %227, %229 : vector<2x32xf32>
    %233 = arith.addf %231, %232 : vector<2x32xf32>
    %234 = math.tanh %233 : vector<2x32xf32>
    %235 = arith.mulf %230, %234 : vector<2x32xf32>
    %c10 = arith.constant 10 : index
    %c0_45 = arith.constant 0 : index
    %236 = vector.load %arg12[%c10, %c0_45] : memref<16x32xf32, #tpu.memory_space<vmem>>, vector<2x32xf32>
    tpu.vector_store %arg12[%c10, %c0_45], %235 {strides = array<i32>} : memref<16x32xf32, #tpu.memory_space<vmem>>, vector<2x32xf32>,
    %237 = vector.extract_strided_slice %10 {offsets = [12, 0], sizes = [2, 128], strides = [1, 1]} : vector<16x128xf32> to vector<2x128xf32>
    %cst_46 = arith.constant dense<0.000000e+00> : vector<2x128xf32>
    %238 = tpu.matmul %217, %0, %cst_46 {dimension_numbers = #tpu.dot_dimension_numbers<[1], [0], [0], [1], [0, 0, 1, 1], [], []>} : vector<2x32xf32>, vector<32x128xf32>, vector<2x128xf32> -> vector<2x128xf32>
    %239 = arith.addf %237, %238 : vector<2x128xf32>
    %240 = arith.negf %239 : vector<2x128xf32>
    %241 = math.exp %240 : vector<2x128xf32>
    %cst_47 = arith.constant 1.000000e+00 : f32
    %242 = vector.broadcast %cst_47 : f32 to vector<2x128xf32>
    %243 = arith.addf %242, %241 : vector<2x128xf32>
    %244 = arith.divf %242, %243 : vector<2x128xf32>
    %245 = math.tanh %239 : vector<2x128xf32>
    %246 = vector.extract_strided_slice %244 {offsets = [0, 0], sizes = [2, 32], strides = [1, 1]} : vector<2x128xf32> to vector<2x32xf32>
    %247 = vector.extract_strided_slice %244 {offsets = [0, 32], sizes = [2, 32], strides = [1, 1]} : vector<2x128xf32> to vector<2x32xf32>
    %248 = vector.extract_strided_slice %245 {offsets = [0, 64], sizes = [2, 32], strides = [1, 1]} : vector<2x128xf32> to vector<2x32xf32>
    %249 = vector.extract_strided_slice %244 {offsets = [0, 96], sizes = [2, 32], strides = [1, 1]} : vector<2x128xf32> to vector<2x32xf32>
    %250 = arith.mulf %247, %215 : vector<2x32xf32>
    %251 = arith.mulf %246, %248 : vector<2x32xf32>
    %252 = arith.addf %250, %251 : vector<2x32xf32>
    %253 = math.tanh %252 : vector<2x32xf32>
    %254 = arith.mulf %249, %253 : vector<2x32xf32>
    %255 = tpu.concatenate %254, %235 in 1 : vector<2x32xf32>, vector<2x32xf32> -> vector<2x64xf32>
    %cst_48 = arith.constant dense<0.000000e+00> : vector<2x128xf32>
    %256 = tpu.matmul %255, %1, %cst_48 {dimension_numbers = #tpu.dot_dimension_numbers<[1], [0], [0], [1], [0, 0, 1, 1], [], []>} : vector<2x64xf32>, vector<64x128xf32>, vector<2x128xf32> -> vector<2x128xf32>
    %257 = arith.addf %256, %4 : vector<2x128xf32>
    %258 = arith.negf %257 : vector<2x128xf32>
    %259 = math.exp %258 : vector<2x128xf32>
    %cst_49 = arith.constant 1.000000e+00 : f32
    %260 = vector.broadcast %cst_49 : f32 to vector<2x128xf32>
    %261 = arith.addf %260, %259 : vector<2x128xf32>
    %262 = arith.divf %260, %261 : vector<2x128xf32>
    %263 = math.tanh %257 : vector<2x128xf32>
    %264 = vector.extract_strided_slice %262 {offsets = [0, 0], sizes = [2, 32], strides = [1, 1]} : vector<2x128xf32> to vector<2x32xf32>
    %265 = vector.extract_strided_slice %262 {offsets = [0, 32], sizes = [2, 32], strides = [1, 1]} : vector<2x128xf32> to vector<2x32xf32>
    %266 = vector.extract_strided_slice %263 {offsets = [0, 64], sizes = [2, 32], strides = [1, 1]} : vector<2x128xf32> to vector<2x32xf32>
    %267 = vector.extract_strided_slice %262 {offsets = [0, 96], sizes = [2, 32], strides = [1, 1]} : vector<2x128xf32> to vector<2x32xf32>
    %268 = arith.mulf %265, %233 : vector<2x32xf32>
    %269 = arith.mulf %264, %266 : vector<2x32xf32>
    %270 = arith.addf %268, %269 : vector<2x32xf32>
    %271 = math.tanh %270 : vector<2x32xf32>
    %272 = arith.mulf %267, %271 : vector<2x32xf32>
    %c12 = arith.constant 12 : index
    %c0_50 = arith.constant 0 : index
    %273 = vector.load %arg12[%c12, %c0_50] : memref<16x32xf32, #tpu.memory_space<vmem>>, vector<2x32xf32>
    tpu.vector_store %arg12[%c12, %c0_50], %272 {strides = array<i32>} : memref<16x32xf32, #tpu.memory_space<vmem>>, vector<2x32xf32>,
    %274 = vector.extract_strided_slice %10 {offsets = [14, 0], sizes = [2, 128], strides = [1, 1]} : vector<16x128xf32> to vector<2x128xf32>
    %cst_51 = arith.constant dense<0.000000e+00> : vector<2x128xf32>
    %275 = tpu.matmul %254, %0, %cst_51 {dimension_numbers = #tpu.dot_dimension_numbers<[1], [0], [0], [1], [0, 0, 1, 1], [], []>} : vector<2x32xf32>, vector<32x128xf32>, vector<2x128xf32> -> vector<2x128xf32>
    %276 = arith.addf %274, %275 : vector<2x128xf32>
    %277 = arith.negf %276 : vector<2x128xf32>
    %278 = math.exp %277 : vector<2x128xf32>
    %cst_52 = arith.constant 1.000000e+00 : f32
    %279 = vector.broadcast %cst_52 : f32 to vector<2x128xf32>
    %280 = arith.addf %279, %278 : vector<2x128xf32>
    %281 = arith.divf %279, %280 : vector<2x128xf32>
    %282 = math.tanh %276 : vector<2x128xf32>
    %283 = vector.extract_strided_slice %281 {offsets = [0, 0], sizes = [2, 32], strides = [1, 1]} : vector<2x128xf32> to vector<2x32xf32>
    %284 = vector.extract_strided_slice %281 {offsets = [0, 32], sizes = [2, 32], strides = [1, 1]} : vector<2x128xf32> to vector<2x32xf32>
    %285 = vector.extract_strided_slice %282 {offsets = [0, 64], sizes = [2, 32], strides = [1, 1]} : vector<2x128xf32> to vector<2x32xf32>
    %286 = vector.extract_strided_slice %281 {offsets = [0, 96], sizes = [2, 32], strides = [1, 1]} : vector<2x128xf32> to vector<2x32xf32>
    %287 = arith.mulf %284, %252 : vector<2x32xf32>
    %288 = arith.mulf %283, %285 : vector<2x32xf32>
    %289 = arith.addf %287, %288 : vector<2x32xf32>
    %290 = math.tanh %289 : vector<2x32xf32>
    %291 = arith.mulf %286, %290 : vector<2x32xf32>
    %292 = tpu.concatenate %291, %272 in 1 : vector<2x32xf32>, vector<2x32xf32> -> vector<2x64xf32>
    %cst_53 = arith.constant dense<0.000000e+00> : vector<2x128xf32>
    %293 = tpu.matmul %292, %1, %cst_53 {dimension_numbers = #tpu.dot_dimension_numbers<[1], [0], [0], [1], [0, 0, 1, 1], [], []>} : vector<2x64xf32>, vector<64x128xf32>, vector<2x128xf32> -> vector<2x128xf32>
    %294 = arith.addf %293, %4 : vector<2x128xf32>
    %295 = arith.negf %294 : vector<2x128xf32>
    %296 = math.exp %295 : vector<2x128xf32>
    %cst_54 = arith.constant 1.000000e+00 : f32
    %297 = vector.broadcast %cst_54 : f32 to vector<2x128xf32>
    %298 = arith.addf %297, %296 : vector<2x128xf32>
    %299 = arith.divf %297, %298 : vector<2x128xf32>
    %300 = math.tanh %294 : vector<2x128xf32>
    %301 = vector.extract_strided_slice %299 {offsets = [0, 0], sizes = [2, 32], strides = [1, 1]} : vector<2x128xf32> to vector<2x32xf32>
    %302 = vector.extract_strided_slice %299 {offsets = [0, 32], sizes = [2, 32], strides = [1, 1]} : vector<2x128xf32> to vector<2x32xf32>
    %303 = vector.extract_strided_slice %300 {offsets = [0, 64], sizes = [2, 32], strides = [1, 1]} : vector<2x128xf32> to vector<2x32xf32>
    %304 = vector.extract_strided_slice %299 {offsets = [0, 96], sizes = [2, 32], strides = [1, 1]} : vector<2x128xf32> to vector<2x32xf32>
    %305 = arith.mulf %302, %270 : vector<2x32xf32>
    %306 = arith.mulf %301, %303 : vector<2x32xf32>
    %307 = arith.addf %305, %306 : vector<2x32xf32>
    %308 = math.tanh %307 : vector<2x32xf32>
    %309 = arith.mulf %304, %308 : vector<2x32xf32>
    %c14 = arith.constant 14 : index
    %c0_55 = arith.constant 0 : index
    %310 = vector.load %arg12[%c14, %c0_55] : memref<16x32xf32, #tpu.memory_space<vmem>>, vector<2x32xf32>
    tpu.vector_store %arg12[%c14, %c0_55], %309 {strides = array<i32>} : memref<16x32xf32, #tpu.memory_space<vmem>>, vector<2x32xf32>,
    %c0_56 = arith.constant 0 : index
    %c0_57 = arith.constant 0 : index
    %311 = vector.load %arg12[%c0_56, %c0_57] : memref<16x32xf32, #tpu.memory_space<vmem>>, vector<16x32xf32>
    %c0_58 = arith.constant 0 : index
    %c0_59 = arith.constant 0 : index
    %312 = vector.load %arg7[%c0_58, %c0_59] : memref<32x32xf32, #tpu.memory_space<vmem>>, vector<32x32xf32>
    %cst_60 = arith.constant dense<0.000000e+00> : vector<16x32xf32>
    %313 = tpu.matmul %311, %312, %cst_60 {dimension_numbers = #tpu.dot_dimension_numbers<[1], [0], [0], [1], [0, 0, 1, 1], [], []>} : vector<16x32xf32>, vector<32x32xf32>, vector<16x32xf32> -> vector<16x32xf32>
    %c0_61 = arith.constant 0 : index
    %c0_62 = arith.constant 0 : index
    %314 = vector.load %arg8[%c0_61, %c0_62] : memref<1x32xf32, #tpu.memory_space<vmem>>, vector<1x32xf32>
    %315 = vector.broadcast %314 : vector<1x32xf32> to vector<16x32xf32>
    %316 = arith.addf %313, %315 : vector<16x32xf32>
    %317 = arith.negf %316 : vector<16x32xf32>
    %318 = math.exp %317 : vector<16x32xf32>
    %cst_63 = arith.constant 1.000000e+00 : f32
    %319 = vector.broadcast %cst_63 : f32 to vector<16x32xf32>
    %320 = arith.addf %319, %318 : vector<16x32xf32>
    %321 = arith.divf %319, %320 : vector<16x32xf32>
    %322 = arith.mulf %316, %321 : vector<16x32xf32>
    %c0_64 = arith.constant 0 : index
    %c0_65 = arith.constant 0 : index
    %323 = vector.load %arg9[%c0_64, %c0_65] : memref<32x128xf32, #tpu.memory_space<vmem>>, vector<32x128xf32>
    %cst_66 = arith.constant dense<0.000000e+00> : vector<16x128xf32>
    %324 = tpu.matmul %322, %323, %cst_66 {dimension_numbers = #tpu.dot_dimension_numbers<[1], [0], [0], [1], [0, 0, 1, 1], [], []>} : vector<16x32xf32>, vector<32x128xf32>, vector<16x128xf32> -> vector<16x128xf32>
    %c0_67 = arith.constant 0 : index
    %c0_68 = arith.constant 0 : index
    %325 = vector.load %arg10[%c0_67, %c0_68] : memref<1x128xf32, #tpu.memory_space<vmem>>, vector<1x128xf32>
    %326 = vector.broadcast %325 : vector<1x128xf32> to vector<16x128xf32>
    %327 = arith.addf %324, %326 : vector<16x128xf32>
    %c0_69 = arith.constant 0 : index
    %c0_70 = arith.constant 0 : index
    %328 = vector.load %arg11[%c0_69, %c0_70] : memref<16x128xf32, #tpu.memory_space<vmem>>, vector<16x128xf32>
    tpu.vector_store %arg11[%c0_69, %c0_70], %327 {strides = array<i32>} : memref<16x128xf32, #tpu.memory_space<vmem>>, vector<16x128xf32>,
    return
  }
  func.func @transform_0(%arg0: i32) -> (i32, i32) {
    %c0_i32 = arith.constant 0 : i32
    %c0_i32_0 = arith.constant 0 : i32
    return %arg0, %c0_i32 : i32, i32
  }
  func.func @transform_1(%arg0: i32) -> (i32, i32) {
    %c0_i32 = arith.constant 0 : i32
    %c0_i32_0 = arith.constant 0 : i32
    %c0_i32_1 = arith.constant 0 : i32
    return %c0_i32, %c0_i32_0 : i32, i32
  }
  func.func @transform_2(%arg0: i32) -> (i32, i32) {
    %c0_i32 = arith.constant 0 : i32
    %c0_i32_0 = arith.constant 0 : i32
    %c0_i32_1 = arith.constant 0 : i32
    return %c0_i32, %c0_i32_0 : i32, i32
  }
  func.func @transform_3(%arg0: i32) -> (i32, i32) {
    %c0_i32 = arith.constant 0 : i32
    %c0_i32_0 = arith.constant 0 : i32
    %c0_i32_1 = arith.constant 0 : i32
    return %c0_i32, %c0_i32_0 : i32, i32
  }
  func.func @transform_4(%arg0: i32) -> (i32, i32) {
    %c0_i32 = arith.constant 0 : i32
    %c0_i32_0 = arith.constant 0 : i32
    %c0_i32_1 = arith.constant 0 : i32
    return %c0_i32, %c0_i32_0 : i32, i32
  }
  func.func @transform_5(%arg0: i32) -> (i32, i32) {
    %c0_i32 = arith.constant 0 : i32
    %c0_i32_0 = arith.constant 0 : i32
    %c0_i32_1 = arith.constant 0 : i32
    return %c0_i32, %c0_i32_0 : i32, i32
  }
  func.func @transform_6(%arg0: i32) -> (i32, i32) {
    %c0_i32 = arith.constant 0 : i32
    %c0_i32_0 = arith.constant 0 : i32
    %c0_i32_1 = arith.constant 0 : i32
    return %c0_i32, %c0_i32_0 : i32, i32
  }
  func.func @transform_7(%arg0: i32) -> (i32, i32) {
    %c0_i32 = arith.constant 0 : i32
    %c0_i32_0 = arith.constant 0 : i32
    %c0_i32_1 = arith.constant 0 : i32
    return %c0_i32, %c0_i32_0 : i32, i32
  }
  func.func @transform_8(%arg0: i32) -> (i32, i32) {
    %c0_i32 = arith.constant 0 : i32
    %c0_i32_0 = arith.constant 0 : i32
    %c0_i32_1 = arith.constant 0 : i32
    return %c0_i32, %c0_i32_0 : i32, i32
  }
  func.func @transform_9(%arg0: i32) -> (i32, i32) {
    %c0_i32 = arith.constant 0 : i32
    %c0_i32_0 = arith.constant 0 : i32
    %c0_i32_1 = arith.constant 0 : i32
    return %c0_i32, %c0_i32_0 : i32, i32
  }
  func.func @transform_10(%arg0: i32) -> (i32, i32) {
    %c0_i32 = arith.constant 0 : i32
    %c0_i32_0 = arith.constant 0 : i32
    return %arg0, %c0_i32 : i32, i32
  }
}

</mosaic_0001>

<llo_original>
// kernel: tpu_custom_call.1
$region0: #{tpu_custom_call.1}
  #allocation0 [shape = 'u32[]', space=smem, size = 0x4, offset = 0x4, fixed_abs, tag = 'smem constant byte address 0x4 - core index']
  #allocation1 [shape = 'u32[144,128]{1,0:T(1,128)}', space=vmem, size = 0x12000, scoped, tag = 'internal scratch']
  #allocation2 [shape = 'f32[16,32]{1,0:T(8,128)}', space=vmem, size = 0x2000, scoped, tag = 'scratch operand']
  %s0 = inlined_call_operand.vmem [shape: f32[16,4], index: 0, kind: input, shape index: {}]
  %s1 = inlined_call_operand.hbm [shape: f32[4,128], index: 1, kind: input, shape index: {}]
  %s2 = inlined_call_operand.hbm [shape: f32[32,128], index: 2, kind: input, shape index: {}]
  %s3 = inlined_call_operand.vmem [shape: f32[1,128], index: 3, kind: input, shape index: {}]
  %s4 = inlined_call_operand.hbm [shape: f32[64,128], index: 4, kind: input, shape index: {}]
  %s5 = inlined_call_operand.vmem [shape: f32[1,128], index: 5, kind: input, shape index: {}]
  %s6 = inlined_call_operand.hbm [shape: f32[32,32], index: 6, kind: input, shape index: {}]
  %s7 = inlined_call_operand.hbm [shape: f32[1,32], index: 7, kind: input, shape index: {}]
  %s8 = inlined_call_operand.vmem [shape: f32[32,128], index: 8, kind: input, shape index: {}]
  %s9 = inlined_call_operand.vmem [shape: f32[1,128], index: 9, kind: input, shape index: {}]
  %s10 = inlined_call_operand.hbm [shape: f32[16,128], index: 10, kind: output, shape index: {}]
  %s11 = sld [smem:[#allocation0]]
  $region70: #{tpu_custom_call.1} parent=0
    _
  %s13 = ssub.s32 1, %s11
  %s14 = scalar_select 0, %s13, %s11
  $region1: #{tpu_custom_call.1} parent=0
    #allocation3 [shape = 'u8[2048]{0}', space=vmem, size = 0x800, scoped, tag = 'input window, operand 1, single buffered']
    #allocation4 [shape = 's32[1]{0}', space=sflag, size = 0x4, scoped, tag = 'scoped memory for tpu_custom_call.1']
    #allocation5 [shape = 's32[1]{0}', space=sflag, size = 0x4, scoped, tag = 'scoped memory for tpu_custom_call.1']
    #allocation6 [shape = 'u8[16384]{0}', space=vmem, size = 0x4000, scoped, tag = 'input window, operand 2, single buffered']
    #allocation7 [shape = 's32[1]{0}', space=sflag, size = 0x4, scoped, tag = 'scoped memory for tpu_custom_call.1']
    #allocation8 [shape = 'u8[32768]{0}', space=vmem, size = 0x8000, scoped, tag = 'input window, operand 4, single buffered']
    #allocation9 [shape = 'u8[16384]{0}', space=vmem, size = 0x4000, scoped, tag = 'input window, operand 6, single buffered']
    #allocation10 [shape = 's32[1]{0}', space=sflag, size = 0x4, scoped, tag = 'scoped memory for tpu_custom_call.1']
    #allocation11 [shape = 'u8[512]{0}', space=vmem, size = 0x400, scoped, tag = 'input window, operand 7, single buffered']
    #allocation12 [shape = 'u8[8192]{0}', space=vmem, size = 0x2000, scoped, tag = 'output window, operand 0, single buffered']
    %15 = vsyncpa [#allocation4], 0
    %16 = vsyncpa [#allocation7], 0
    %17 = vsyncpa [#allocation10], 0
    %18 = vsyncpa [#allocation5], 0
    // Predicated region
    $region2: #{tpu_custom_call.1} parent=1 // pred_check
      _
    $region3: #{tpu_custom_call.1} parent=1 // pred_check_branch
      %20 = sbr.rel (0) target = $region5
    $region4: #{tpu_custom_call.1} parent=1 // pred_region
      _
    $region5: #{tpu_custom_call.1} parent=1 // pred_fallthru
      _
    // Predicated region
    $region6: #{tpu_custom_call.1} parent=1 // pred_check
      _
    $region7: #{tpu_custom_call.1} parent=1 // pred_check_branch
      %22 = sbr.rel (0) target = $region9
    $region8: #{tpu_custom_call.1} parent=1 // pred_region
      %s24 = ssub.s32 64, 64
      %25 = vsyncadd [#allocation4], %s24
      %s27 = sshll.u32 [#allocation3], 4
      %s28 = int_to_ptr.vmem [resolvable:$true] %s27
      %30 = dma.hbm_to_vmem [thread:$0]  %s1, 64, %s28, [#allocation4]
    $region9: #{tpu_custom_call.1} parent=1 // pred_fallthru
      _
    // Predicated region
    $region10: #{tpu_custom_call.1} parent=1 // pred_check
      _
    $region11: #{tpu_custom_call.1} parent=1 // pred_check_branch
      %32 = sbr.rel (0) target = $region13
    $region12: #{tpu_custom_call.1} parent=1 // pred_region
      %s34 = ssub.s32 512, 512
      %35 = vsyncadd [#allocation7], %s34
      %s36 = sshll.u32 [#allocation6], 4
      %s37 = int_to_ptr.vmem [resolvable:$true] %s36
      %42 = dma.hbm_to_vmem [thread:$0]  %s2, 512, %s37, [#allocation7], 128, 128, 8
    $region13: #{tpu_custom_call.1} parent=1 // pred_fallthru
      _
    // Predicated region
    $region14: #{tpu_custom_call.1} parent=1 // pred_check
      _
    $region15: #{tpu_custom_call.1} parent=1 // pred_check_branch
      %44 = sbr.rel (0) target = $region17
    $region16: #{tpu_custom_call.1} parent=1 // pred_region
      _
    $region17: #{tpu_custom_call.1} parent=1 // pred_fallthru
      _
    // Predicated region
    $region18: #{tpu_custom_call.1} parent=1 // pred_check
      _
    $region19: #{tpu_custom_call.1} parent=1 // pred_check_branch
      %46 = sbr.rel (0) target = $region21
    $region20: #{tpu_custom_call.1} parent=1 // pred_region
      %s48 = ssub.s32 1024, 1024
      %49 = vsyncadd [#allocation7], %s48
      %s50 = sshll.u32 [#allocation8], 4
      %s51 = int_to_ptr.vmem [resolvable:$true] %s50
      %56 = dma.hbm_to_vmem [thread:$0]  %s4, 1024, %s51, [#allocation7], 128, 128, 8
    $region21: #{tpu_custom_call.1} parent=1 // pred_fallthru
      _
    // Predicated region
    $region22: #{tpu_custom_call.1} parent=1 // pred_check
      _
    $region23: #{tpu_custom_call.1} parent=1 // pred_check_branch
      %58 = sbr.rel (0) target = $region25
    $region24: #{tpu_custom_call.1} parent=1 // pred_region
      _
    $region25: #{tpu_custom_call.1} parent=1 // pred_fallthru
      _
    // Predicated region
    $region26: #{tpu_custom_call.1} parent=1 // pred_check
      _
    $region27: #{tpu_custom_call.1} parent=1 // pred_check_branch
      %60 = sbr.rel (0) target = $region29
    $region28: #{tpu_custom_call.1} parent=1 // pred_region
      %s62 = ssub.s32 512, 512
      %63 = vsyncadd [#allocation10], %s62
      %s64 = sshll.u32 [#allocation9], 4
      %s65 = int_to_ptr.vmem [resolvable:$true] %s64
      %70 = dma.hbm_to_vmem [thread:$0]  %s6, 512, %s65, [#allocation10], 128, 128, 8
    $region29: #{tpu_custom_call.1} parent=1 // pred_fallthru
      _
    // Predicated region
    $region30: #{tpu_custom_call.1} parent=1 // pred_check
      _
    $region31: #{tpu_custom_call.1} parent=1 // pred_check_branch
      %72 = sbr.rel (0) target = $region33
    $region32: #{tpu_custom_call.1} parent=1 // pred_region
      %s74 = ssub.s32 16, 16
      %75 = vsyncadd [#allocation10], %s74
      %s77 = sshll.u32 [#allocation11], 4
      %s78 = int_to_ptr.vmem [resolvable:$true] %s77
      %80 = dma.hbm_to_vmem [thread:$0]  %s7, 16, %s78, [#allocation10]
    $region33: #{tpu_custom_call.1} parent=1 // pred_fallthru
      _
    // Predicated region
    $region34: #{tpu_custom_call.1} parent=1 // pred_check
      _
    $region35: #{tpu_custom_call.1} parent=1 // pred_check_branch
      %82 = sbr.rel (0) target = $region37
    $region36: #{tpu_custom_call.1} parent=1 // pred_region
      _
    $region37: #{tpu_custom_call.1} parent=1 // pred_fallthru
      _
    // Predicated region
    $region38: #{tpu_custom_call.1} parent=1 // pred_check
      _
    $region39: #{tpu_custom_call.1} parent=1 // pred_check_branch
      %84 = sbr.rel (0) target = $region41
    $region40: #{tpu_custom_call.1} parent=1 // pred_region
      _
    $region41: #{tpu_custom_call.1} parent=1 // pred_fallthru
      _
    // Predicated region
    $region42: #{tpu_custom_call.1} parent=1 // pred_check
      _
    $region43: #{tpu_custom_call.1} parent=1 // pred_check_branch
      %86 = sbr.rel (0) target = $region45
    $region44: #{tpu_custom_call.1} parent=1 // pred_region
      %87 = dma.done [#allocation4], 64
    $region45: #{tpu_custom_call.1} parent=1 // pred_fallthru
      _
    // Predicated region
    $region46: #{tpu_custom_call.1} parent=1 // pred_check
      _
    $region47: #{tpu_custom_call.1} parent=1 // pred_check_branch
      %89 = sbr.rel (0) target = $region49
    $region48: #{tpu_custom_call.1} parent=1 // pred_region
      %90 = dma.done [#allocation7], 512
    $region49: #{tpu_custom_call.1} parent=1 // pred_fallthru
      _
    // Predicated region
    $region50: #{tpu_custom_call.1} parent=1 // pred_check
      _
    $region51: #{tpu_custom_call.1} parent=1 // pred_check_branch
      %92 = sbr.rel (0) target = $region53
    $region52: #{tpu_custom_call.1} parent=1 // pred_region
      %93 = dma.done [#allocation7], 1024
    $region53: #{tpu_custom_call.1} parent=1 // pred_fallthru
      _
    // Predicated region
    $region54: #{tpu_custom_call.1} parent=1 // pred_check
      _
    $region55: #{tpu_custom_call.1} parent=1 // pred_check_branch
      %95 = sbr.rel (0) target = $region57
    $region56: #{tpu_custom_call.1} parent=1 // pred_region
      %96 = dma.done [#allocation10], 512
    $region57: #{tpu_custom_call.1} parent=1 // pred_fallthru
      _
    // Predicated region
    $region58: #{tpu_custom_call.1} parent=1 // pred_check
      _
    $region59: #{tpu_custom_call.1} parent=1 // pred_check_branch
      %98 = sbr.rel (0) target = $region61
    $region60: #{tpu_custom_call.1} parent=1 // pred_region
      %99 = dma.done [#allocation10], 16
    $region61: #{tpu_custom_call.1} parent=1 // pred_fallthru
      _
    %v100 = vld [vmem:[#allocation6] sm:$0xff]
    %v101 = vld [vmem:[#allocation6 + $0x8] sm:$0xff]
    %v102 = vld [vmem:[#allocation6 + $0x10] sm:$0xff]
    %v103 = vld [vmem:[#allocation6 + $0x18] sm:$0xff]
    %v104 = vld [vmem:[#allocation8] sm:$0xff]
    %v105 = vld [vmem:[#allocation8 + $0x8] sm:$0xff]
    %v106 = vld [vmem:[#allocation8 + $0x10] sm:$0xff]
    %v107 = vld [vmem:[#allocation8 + $0x18] sm:$0xff]
    %v108 = vld [vmem:[#allocation8 + $0x20] sm:$0xff]
    %v109 = vld [vmem:[#allocation8 + $0x28] sm:$0xff]
    %v110 = vld [vmem:[#allocation8 + $0x30] sm:$0xff]
    %v111 = vld [vmem:[#allocation8 + $0x38] sm:$0xff]
    %v112 = vld [vmem:[%s5] sm:$0x1]
    %v114 = vlaneseq
    %v115 = vshrl.u32 %v114, 7
    %v116 = vsub.s32 0, %v115
    %v117 = vrot.slane %v112, %v116
    %v119 = vld [vmem:[%s0] sm:$0xff]
    %v120 = vld [vmem:[%s0 + $0x8] sm:$0xff]
    %v121 = vld [vmem:[#allocation3] sm:$0xf]
    %v122 = vld [vmem:[%s3] sm:$0x1]
    %v124 = vlaneseq
    %v125 = vshrl.u32 %v124, 7
    %v126 = vsub.s32 0, %v125
    %v127 = vrot.slane %v122, %v126
    %vm129 = vcmask 31744
    %v131 = vsel %vm129, %v119, 0
    %v134 = vsel %vm129, %v120, 0
    %vm136 = vcmask 1043456
    %v138 = vsel %vm136, %v121, 0
    %140 = vmatprep.subr.mxu0 0.0
    %141 = vmatpush1.msra.mxu0 0.0
    %142 = vmatprep.subr.mxu0 0.0
    %143 = vmatpush1.msra.mxu0 0.0
    %144 = vmatprep.subr.mxu0 0.0
    %145 = vmatpush1.msra.mxu0 0.0
    %146 = vmatprep.subr.mxu0 0.0
    %147 = vmatpush1.msra.mxu0 0.0
    %148 = vmatprep.subr.mxu0 0.0
    %149 = vmatpush1.msra.mxu0 0.0
    %150 = vmatprep.subr.mxu0 0.0
    %151 = vmatpush1.msra.mxu0 0.0
    %152 = vmatprep.subr.mxu0 0.0
    %153 = vmatpush1.msra.mxu0 0.0
    %154 = vmatprep.subr.mxu0 0.0
    %155 = vmatpush1.msra.mxu0 0.0
    %156 = vmatprep.subr.mxu0 0.0
    %157 = vmatpush1.msra.mxu0 0.0
    %158 = vmatprep.subr.mxu0 0.0
    %159 = vmatpush1.msra.mxu0 0.0
    %160 = vmatprep.subr.mxu0 0.0
    %161 = vmatpush1.msra.mxu0 0.0
    %162 = vmatprep.subr.mxu0 0.0
    %163 = vmatpush1.msra.mxu0 0.0
    %164 = vmatprep.subr.mxu0 0.0
    %165 = vmatpush1.msra.mxu0 0.0
    %166 = vmatprep.subr.mxu0 0.0
    %167 = vmatpush1.msra.mxu0 0.0
    %168 = vmatprep.subr.mxu0 0.0
    %169 = vmatpush1.msra.mxu0 0.0
    %170 = vmatprep.subr.mxu0 0.0
    %171 = vmatpush1.msra.mxu0 %v138
    %172 = vmatprep.subr.mxu0 0.0
    %173 = vmatpush2.msra.mxu0 0.0
    %174 = vmatprep.subr.mxu0 0.0
    %175 = vmatpush2.msra.mxu0 0.0
    %176 = vmatprep.subr.mxu0 0.0
    %177 = vmatpush2.msra.mxu0 0.0
    %178 = vmatprep.subr.mxu0 0.0
    %179 = vmatpush2.msra.mxu0 0.0
    %180 = vmatprep.subr.mxu0 0.0
    %181 = vmatpush2.msra.mxu0 0.0
    %182 = vmatprep.subr.mxu0 0.0
    %183 = vmatpush2.msra.mxu0 0.0
    %184 = vmatprep.subr.mxu0 0.0
    %185 = vmatpush2.msra.mxu0 0.0
    %186 = vmatprep.subr.mxu0 0.0
    %187 = vmatpush2.msra.mxu0 0.0
    %188 = vmatprep.subr.mxu0 0.0
    %189 = vmatpush2.msra.mxu0 0.0
    %190 = vmatprep.subr.mxu0 0.0
    %191 = vmatpush2.msra.mxu0 0.0
    %192 = vmatprep.subr.mxu0 0.0
    %193 = vmatpush2.msra.mxu0 0.0
    %194 = vmatprep.subr.mxu0 0.0
    %195 = vmatpush2.msra.mxu0 0.0
    %196 = vmatprep.subr.mxu0 0.0
    %197 = vmatpush2.msra.mxu0 0.0
    %198 = vmatprep.subr.mxu0 0.0
    %199 = vmatpush2.msra.mxu0 0.0
    %200 = vmatprep.subr.mxu0 0.0
    %201 = vmatpush2.msra.mxu0 0.0
    %202 = vmatprep.subr.mxu0 0.0
    %203 = vmatpush2.msra.mxu0 0.0
    %204 = vmatprep.mubr.f32.mxu0 0.0
    %205 = vmatmul.mubr.f32.gmra.mxu0 %v131
    %v206 = vpop.f32.mrf.mxu0
    %v207 = vadd.f32 %v127, %v206
    %v208 = vpop.f32.mrf.mxu0
    %209 = vmatprep.mubr.f32.mxu0 0.0
    %210 = vmatmul.mubr.f32.gmra.mxu0 %v134
    %v211 = vpop.f32.mrf.mxu0
    %v212 = vadd.f32 %v127, %v211
    %v213 = vpop.f32.mrf.mxu0
    %214 = vdwg.mxu0
    %vm215 = vcmask 261120
    %v217 = vsel %vm215, 0.0, 0
    %219 = vmatprep.subr.mxu0 0.0
    %220 = vmatpush1.msra.mxu0 0.0
    %221 = vmatprep.subr.mxu0 0.0
    %222 = vmatpush1.msra.mxu0 0.0
    %223 = vmatprep.subr.mxu0 0.0
    %224 = vmatpush1.msra.mxu0 0.0
    %225 = vmatprep.subr.mxu0 0.0
    %226 = vmatpush1.msra.mxu0 0.0
    %227 = vmatprep.subr.mxu0 0.0
    %228 = vmatpush1.msra.mxu0 0.0
    %229 = vmatprep.subr.mxu0 0.0
    %230 = vmatpush1.msra.mxu0 0.0
    %231 = vmatprep.subr.mxu0 0.0
    %232 = vmatpush1.msra.mxu0 0.0
    %233 = vmatprep.subr.mxu0 0.0
    %234 = vmatpush1.msra.mxu0 0.0
    %235 = vmatprep.subr.mxu0 0.0
    %236 = vmatpush1.msra.mxu0 0.0
    %237 = vmatprep.subr.mxu0 0.0
    %238 = vmatpush1.msra.mxu0 0.0
    %239 = vmatprep.subr.mxu0 0.0
    %240 = vmatpush1.msra.mxu0 0.0
    %241 = vmatprep.subr.mxu0 0.0
    %242 = vmatpush1.msra.mxu0 0.0
    %243 = vmatprep.subr.mxu0 0.0
    %244 = vmatpush1.msra.mxu0 %v103
    %245 = vmatprep.subr.mxu0 0.0
    %246 = vmatpush1.msra.mxu0 %v102
    %247 = vmatprep.subr.mxu0 0.0
    %248 = vmatpush1.msra.mxu0 %v101
    %249 = vmatprep.subr.mxu0 0.0
    %250 = vmatpush1.msra.mxu0 %v100
    %251 = vmatprep.subr.mxu0 0.0
    %252 = vmatpush2.msra.mxu0 0.0
    %253 = vmatprep.subr.mxu0 0.0
    %254 = vmatpush2.msra.mxu0 0.0
    %255 = vmatprep.subr.mxu0 0.0
    %256 = vmatpush2.msra.mxu0 0.0
    %257 = vmatprep.subr.mxu0 0.0
    %258 = vmatpush2.msra.mxu0 0.0
    %259 = vmatprep.subr.mxu0 0.0
    %260 = vmatpush2.msra.mxu0 0.0
    %261 = vmatprep.subr.mxu0 0.0
    %262 = vmatpush2.msra.mxu0 0.0
    %263 = vmatprep.subr.mxu0 0.0
    %264 = vmatpush2.msra.mxu0 0.0
    %265 = vmatprep.subr.mxu0 0.0
    %266 = vmatpush2.msra.mxu0 0.0
    %267 = vmatprep.subr.mxu0 0.0
    %268 = vmatpush2.msra.mxu0 0.0
    %269 = vmatprep.subr.mxu0 0.0
    %270 = vmatpush2.msra.mxu0 0.0
    %271 = vmatprep.subr.mxu0 0.0
    %272 = vmatpush2.msra.mxu0 0.0
    %273 = vmatprep.subr.mxu0 0.0
    %274 = vmatpush2.msra.mxu0 0.0
    %275 = vmatprep.subr.mxu0 0.0
    %276 = vmatpush2.msra.mxu0 0.0
    %277 = vmatprep.subr.mxu0 0.0
    %278 = vmatpush2.msra.mxu0 0.0
    %279 = vmatprep.subr.mxu0 0.0
    %280 = vmatpush2.msra.mxu0 0.0
    %281 = vmatprep.subr.mxu0 0.0
    %282 = vmatpush2.msra.mxu0 0.0
    %283 = vmatprep.mubr.f32.mxu0 0.0
    %284 = vmatmul.mubr.f32.gmra.mxu0 %v217
    %v285 = vpop.f32.mrf.mxu0
    %v286 = vadd.f32 0.0, %v285
    %v287 = vpop.f32.mrf.mxu0
    %288 = vdwg.mxu0
    %v289 = vadd.f32 %v207, %v286
    %v290 = vxor.u32 %v289, 2147483648
    %v291 = vmul.f32 %v290, 1.442695
    %v292 = vpow.pop %v291
    %v293 = vadd.f32 %v292, 1.0
    %v294 = vrcp.pop %v293
    %v295 = vmul.f32 1.0, %v294
    %v296 = vtanh.pop %v289
    %v297 = vmul.f32 %v295, 0.0
    %299 = vrot.lane.b32.xlu0 %v296, 64
    %v300 = vpop.permute.xlu0 %299
    %v302 = vmul.f32 %v295, %v300
    %304 = vrot.lane.b32.xlu0 %v302, 32
    %v305 = vpop.permute.xlu0 %304
    %v307 = vadd.f32 %v297, %v305
    %v308 = vtanh.pop %v307
    %310 = vrot.lane.b32.xlu0 %v308, 64
    %v311 = vpop.permute.xlu0 %310
    %v313 = vmul.f32 %v295, %v311
    %315 = vrot.lane.b32.xlu0 %v313, 32
    %v316 = vpop.permute.xlu0 %315
    %v318 = vsel %vm215, %v316, 0.0
    %vm319 = vcmask 523264
    %v321 = vsel %vm319, %v318, 0
    %323 = vmatprep.subr.mxu0 0.0
    %324 = vmatpush1.msra.mxu0 0.0
    %325 = vmatprep.subr.mxu0 0.0
    %326 = vmatpush1.msra.mxu0 0.0
    %327 = vmatprep.subr.mxu0 0.0
    %328 = vmatpush1.msra.mxu0 0.0
    %329 = vmatprep.subr.mxu0 0.0
    %330 = vmatpush1.msra.mxu0 0.0
    %331 = vmatprep.subr.mxu0 0.0
    %332 = vmatpush1.msra.mxu0 0.0
    %333 = vmatprep.subr.mxu0 0.0
    %334 = vmatpush1.msra.mxu0 0.0
    %335 = vmatprep.subr.mxu0 0.0
    %336 = vmatpush1.msra.mxu0 0.0
    %337 = vmatprep.subr.mxu0 0.0
    %338 = vmatpush1.msra.mxu0 0.0
    %339 = vmatprep.subr.mxu0 0.0
    %340 = vmatpush1.msra.mxu0 %v111
    %341 = vmatprep.subr.mxu0 0.0
    %342 = vmatpush1.msra.mxu0 %v110
    %343 = vmatprep.subr.mxu0 0.0
    %344 = vmatpush1.msra.mxu0 %v109
    %345 = vmatprep.subr.mxu0 0.0
    %346 = vmatpush1.msra.mxu0 %v108
    %347 = vmatprep.subr.mxu0 0.0
    %348 = vmatpush1.msra.mxu0 %v107
    %349 = vmatprep.subr.mxu0 0.0
    %350 = vmatpush1.msra.mxu0 %v106
    %351 = vmatprep.subr.mxu0 0.0
    %352 = vmatpush1.msra.mxu0 %v105
    %353 = vmatprep.subr.mxu0 0.0
    %354 = vmatpush1.msra.mxu0 %v104
    %355 = vmatprep.subr.mxu0 0.0
    %356 = vmatpush2.msra.mxu0 0.0
    %357 = vmatprep.subr.mxu0 0.0
    %358 = vmatpush2.msra.mxu0 0.0
    %359 = vmatprep.subr.mxu0 0.0
    %360 = vmatpush2.msra.mxu0 0.0
    %361 = vmatprep.subr.mxu0 0.0
    %362 = vmatpush2.msra.mxu0 0.0
    %363 = vmatprep.subr.mxu0 0.0
    %364 = vmatpush2.msra.mxu0 0.0
    %365 = vmatprep.subr.mxu0 0.0
    %366 = vmatpush2.msra.mxu0 0.0
    %367 = vmatprep.subr.mxu0 0.0
    %368 = vmatpush2.msra.mxu0 0.0
    %369 = vmatprep.subr.mxu0 0.0
    %370 = vmatpush2.msra.mxu0 0.0
    %371 = vmatprep.subr.mxu0 0.0
    %372 = vmatpush2.msra.mxu0 0.0
    %373 = vmatprep.subr.mxu0 0.0
    %374 = vmatpush2.msra.mxu0 0.0
    %375 = vmatprep.subr.mxu0 0.0
    %376 = vmatpush2.msra.mxu0 0.0
    %377 = vmatprep.subr.mxu0 0.0
    %378 = vmatpush2.msra.mxu0 0.0
    %379 = vmatprep.subr.mxu0 0.0
    %380 = vmatpush2.msra.mxu0 0.0
    %381 = vmatprep.subr.mxu0 0.0
    %382 = vmatpush2.msra.mxu0 0.0
    %383 = vmatprep.subr.mxu0 0.0
    %384 = vmatpush2.msra.mxu0 0.0
    %385 = vmatprep.subr.mxu0 0.0
    %386 = vmatpush2.msra.mxu0 0.0
    %387 = vmatprep.mubr.f32.mxu0 0.0
    %388 = vmatmul.mubr.f32.gmra.mxu0 %v321
    %v389 = vpop.f32.mrf.mxu0
    %v390 = vadd.f32 %v117, %v389
    %v391 = vpop.f32.mrf.mxu0
    %392 = vdwg.mxu0
    %v393 = vxor.u32 %v390, 2147483648
    %v394 = vmul.f32 %v393, 1.442695
    %v395 = vpow.pop %v394
    %v396 = vadd.f32 %v395, 1.0
    %v397 = vrcp.pop %v396
    %v398 = vmul.f32 1.0, %v397
    %v399 = vtanh.pop %v390
    %v400 = vmul.f32 %v398, 0.0
    %402 = vrot.lane.b32.xlu0 %v399, 64
    %v403 = vpop.permute.xlu0 %402
    %v405 = vmul.f32 %v398, %v403
    %407 = vrot.lane.b32.xlu0 %v405, 32
    %v408 = vpop.permute.xlu0 %407
    %v410 = vadd.f32 %v400, %v408
    %v411 = vtanh.pop %v410
    %413 = vrot.lane.b32.xlu0 %v411, 64
    %v414 = vpop.permute.xlu0 %413
    %v416 = vmul.f32 %v398, %v414
    %418 = vrot.lane.b32.xlu0 %v416, 32
    %v419 = vpop.permute.xlu0 %418
    %vm421 = vcmask 254976
    %422 = vst.msk [vmem:[#allocation2] sm:$0x3] %vm421, %v419
    %v423 = vsel %vm215, %v316, 0
    %425 = vmatprep.subr.mxu0 0.0
    %426 = vmatpush1.msra.mxu0 0.0
    %427 = vmatprep.subr.mxu0 0.0
    %428 = vmatpush1.msra.mxu0 0.0
    %429 = vmatprep.subr.mxu0 0.0
    %430 = vmatpush1.msra.mxu0 0.0
    %431 = vmatprep.subr.mxu0 0.0
    %432 = vmatpush1.msra.mxu0 0.0
    %433 = vmatprep.subr.mxu0 0.0
    %434 = vmatpush1.msra.mxu0 0.0
    %435 = vmatprep.subr.mxu0 0.0
    %436 = vmatpush1.msra.mxu0 0.0
    %437 = vmatprep.subr.mxu0 0.0
    %438 = vmatpush1.msra.mxu0 0.0
    %439 = vmatprep.subr.mxu0 0.0
    %440 = vmatpush1.msra.mxu0 0.0
    %441 = vmatprep.subr.mxu0 0.0
    %442 = vmatpush1.msra.mxu0 0.0
    %443 = vmatprep.subr.mxu0 0.0
    %444 = vmatpush1.msra.mxu0 0.0
    %445 = vmatprep.subr.mxu0 0.0
    %446 = vmatpush1.msra.mxu0 0.0
    %447 = vmatprep.subr.mxu0 0.0
    %448 = vmatpush1.msra.mxu0 0.0
    %449 = vmatprep.subr.mxu0 0.0
    %450 = vmatpush1.msra.mxu0 %v103
    %451 = vmatprep.subr.mxu0 0.0
    %452 = vmatpush1.msra.mxu0 %v102
    %453 = vmatprep.subr.mxu0 0.0
    %454 = vmatpush1.msra.mxu0 %v101
    %455 = vmatprep.subr.mxu0 0.0
    %456 = vmatpush1.msra.mxu0 %v100
    %457 = vmatprep.subr.mxu0 0.0
    %458 = vmatpush2.msra.mxu0 0.0
    %459 = vmatprep.subr.mxu0 0.0
    %460 = vmatpush2.msra.mxu0 0.0
    %461 = vmatprep.subr.mxu0 0.0
    %462 = vmatpush2.msra.mxu0 0.0
    %463 = vmatprep.subr.mxu0 0.0
    %464 = vmatpush2.msra.mxu0 0.0
    %465 = vmatprep.subr.mxu0 0.0
    %466 = vmatpush2.msra.mxu0 0.0
    %467 = vmatprep.subr.mxu0 0.0
    %468 = vmatpush2.msra.mxu0 0.0
    %469 = vmatprep.subr.mxu0 0.0
    %470 = vmatpush2.msra.mxu0 0.0
    %471 = vmatprep.subr.mxu0 0.0
    %472 = vmatpush2.msra.mxu0 0.0
    %473 = vmatprep.subr.mxu0 0.0
    %474 = vmatpush2.msra.mxu0 0.0
    %475 = vmatprep.subr.mxu0 0.0
    %476 = vmatpush2.msra.mxu0 0.0
    %477 = vmatprep.subr.mxu0 0.0
    %478 = vmatpush2.msra.mxu0 0.0
    %479 = vmatprep.subr.mxu0 0.0
    %480 = vmatpush2.msra.mxu0 0.0
    %481 = vmatprep.subr.mxu0 0.0
    %482 = vmatpush2.msra.mxu0 0.0
    %483 = vmatprep.subr.mxu0 0.0
    %484 = vmatpush2.msra.mxu0 0.0
    %485 = vmatprep.subr.mxu0 0.0
    %486 = vmatpush2.msra.mxu0 0.0
    %487 = vmatprep.subr.mxu0 0.0
    %488 = vmatpush2.msra.mxu0 0.0
    %489 = vmatprep.mubr.f32.mxu0 0.0
    %490 = vmatmul.mubr.f32.gmra.mxu0 %v423
    %v491 = vpop.f32.mrf.mxu0
    %v492 = vadd.f32 0.0, %v491
    %v493 = vpop.f32.mrf.mxu0
    %494 = vdwg.mxu0
    %v496 = vrot.slane %v492, 6
    %v498 = vadd.f32 %v207, %v496
    %v499 = vxor.u32 %v498, 2147483648
    %v500 = vmul.f32 %v499, 1.442695
    %v501 = vpow.pop %v500
    %v502 = vadd.f32 %v501, 1.0
    %v503 = vrcp.pop %v502
    %v504 = vmul.f32 1.0, %v503
    %v505 = vtanh.pop %v498
    %v507 = vrot.slane %v307, 6
    %v509 = vmul.f32 %v504, %v507
    %511 = vrot.lane.b32.xlu0 %v505, 64
    %v512 = vpop.permute.xlu0 %511
    %v514 = vmul.f32 %v504, %v512
    %516 = vrot.lane.b32.xlu0 %v514, 32
    %v517 = vpop.permute.xlu0 %516
    %v519 = vadd.f32 %v509, %v517
    %v520 = vtanh.pop %v519
    %522 = vrot.lane.b32.xlu0 %v520, 64
    %v523 = vpop.permute.xlu0 %522
    %v525 = vmul.f32 %v504, %v523
    %527 = vrot.lane.b32.xlu0 %v525, 32
    %v528 = vpop.permute.xlu0 %527
    %v530 = vrot.slane %v416, 6
    %531 = vrot.lane.b32.xlu0 %v530, 64
    %v532 = vpop.permute.xlu0 %531
    %v534 = vsel %vm215, %v528, %v532
    %v536 = vrot.slane %v534, 2
    %v537 = vsel %vm319, %v536, 0
    %539 = vmatprep.subr.mxu0 0.0
    %540 = vmatpush1.msra.mxu0 0.0
    %541 = vmatprep.subr.mxu0 0.0
    %542 = vmatpush1.msra.mxu0 0.0
    %543 = vmatprep.subr.mxu0 0.0
    %544 = vmatpush1.msra.mxu0 0.0
    %545 = vmatprep.subr.mxu0 0.0
    %546 = vmatpush1.msra.mxu0 0.0
    %547 = vmatprep.subr.mxu0 0.0
    %548 = vmatpush1.msra.mxu0 0.0
    %549 = vmatprep.subr.mxu0 0.0
    %550 = vmatpush1.msra.mxu0 0.0
    %551 = vmatprep.subr.mxu0 0.0
    %552 = vmatpush1.msra.mxu0 0.0
    %553 = vmatprep.subr.mxu0 0.0
    %554 = vmatpush1.msra.mxu0 0.0
    %555 = vmatprep.subr.mxu0 0.0
    %556 = vmatpush1.msra.mxu0 %v111
    %557 = vmatprep.subr.mxu0 0.0
    %558 = vmatpush1.msra.mxu0 %v110
    %559 = vmatprep.subr.mxu0 0.0
    %560 = vmatpush1.msra.mxu0 %v109
    %561 = vmatprep.subr.mxu0 0.0
    %562 = vmatpush1.msra.mxu0 %v108
    %563 = vmatprep.subr.mxu0 0.0
    %564 = vmatpush1.msra.mxu0 %v107
    %565 = vmatprep.subr.mxu0 0.0
    %566 = vmatpush1.msra.mxu0 %v106
    %567 = vmatprep.subr.mxu0 0.0
    %568 = vmatpush1.msra.mxu0 %v105
    %569 = vmatprep.subr.mxu0 0.0
    %570 = vmatpush1.msra.mxu0 %v104
    %571 = vmatprep.subr.mxu0 0.0
    %572 = vmatpush2.msra.mxu0 0.0
    %573 = vmatprep.subr.mxu0 0.0
    %574 = vmatpush2.msra.mxu0 0.0
    %575 = vmatprep.subr.mxu0 0.0
    %576 = vmatpush2.msra.mxu0 0.0
    %577 = vmatprep.subr.mxu0 0.0
    %578 = vmatpush2.msra.mxu0 0.0
    %579 = vmatprep.subr.mxu0 0.0
    %580 = vmatpush2.msra.mxu0 0.0
    %581 = vmatprep.subr.mxu0 0.0
    %582 = vmatpush2.msra.mxu0 0.0
    %583 = vmatprep.subr.mxu0 0.0
    %584 = vmatpush2.msra.mxu0 0.0
    %585 = vmatprep.subr.mxu0 0.0
    %586 = vmatpush2.msra.mxu0 0.0
    %587 = vmatprep.subr.mxu0 0.0
    %588 = vmatpush2.msra.mxu0 0.0
    %589 = vmatprep.subr.mxu0 0.0
    %590 = vmatpush2.msra.mxu0 0.0
    %591 = vmatprep.subr.mxu0 0.0
    %592 = vmatpush2.msra.mxu0 0.0
    %593 = vmatprep.subr.mxu0 0.0
    %594 = vmatpush2.msra.mxu0 0.0
    %595 = vmatprep.subr.mxu0 0.0
    %596 = vmatpush2.msra.mxu0 0.0
    %597 = vmatprep.subr.mxu0 0.0
    %598 = vmatpush2.msra.mxu0 0.0
    %599 = vmatprep.subr.mxu0 0.0
    %600 = vmatpush2.msra.mxu0 0.0
    %601 = vmatprep.subr.mxu0 0.0
    %602 = vmatpush2.msra.mxu0 0.0
    %603 = vmatprep.mubr.f32.mxu0 0.0
    %604 = vmatmul.mubr.f32.gmra.mxu0 %v537
    %v605 = vpop.f32.mrf.mxu0
    %v606 = vadd.f32 %v117, %v605
    %v607 = vpop.f32.mrf.mxu0
    %608 = vdwg.mxu0
    %v609 = vxor.u32 %v606, 2147483648
    %v610 = vmul.f32 %v609, 1.442695
    %v611 = vpow.pop %v610
    %v612 = vadd.f32 %v611, 1.0
    %v613 = vrcp.pop %v612
    %v614 = vmul.f32 1.0, %v613
    %v615 = vtanh.pop %v606
    %v616 = vmul.f32 %v614, %v410
    %618 = vrot.lane.b32.xlu0 %v615, 64
    %v619 = vpop.permute.xlu0 %618
    %v621 = vmul.f32 %v614, %v619
    %623 = vrot.lane.b32.xlu0 %v621, 32
    %v624 = vpop.permute.xlu0 %623
    %v626 = vadd.f32 %v616, %v624
    %v627 = vtanh.pop %v626
    %629 = vrot.lane.b32.xlu0 %v627, 64
    %v630 = vpop.permute.xlu0 %629
    %v632 = vmul.f32 %v614, %v630
    %634 = vrot.lane.b32.xlu0 %v632, 32
    %v635 = vpop.permute.xlu0 %634
    %637 = vst.msk [vmem:[#allocation2 + $0x2] sm:$0x3] %vm421, %v635
    %v638 = vrot.slane %v525, 2
    %639 = vrot.lane.b32.xlu0 %v638, 32
    %v640 = vpop.permute.xlu0 %639
    %v641 = vsel %vm215, %v640, 0
    %643 = vmatprep.subr.mxu0 0.0
    %644 = vmatpush1.msra.mxu0 0.0
    %645 = vmatprep.subr.mxu0 0.0
    %646 = vmatpush1.msra.mxu0 0.0
    %647 = vmatprep.subr.mxu0 0.0
    %648 = vmatpush1.msra.mxu0 0.0
    %649 = vmatprep.subr.mxu0 0.0
    %650 = vmatpush1.msra.mxu0 0.0
    %651 = vmatprep.subr.mxu0 0.0
    %652 = vmatpush1.msra.mxu0 0.0
    %653 = vmatprep.subr.mxu0 0.0
    %654 = vmatpush1.msra.mxu0 0.0
    %655 = vmatprep.subr.mxu0 0.0
    %656 = vmatpush1.msra.mxu0 0.0
    %657 = vmatprep.subr.mxu0 0.0
    %658 = vmatpush1.msra.mxu0 0.0
    %659 = vmatprep.subr.mxu0 0.0
    %660 = vmatpush1.msra.mxu0 0.0
    %661 = vmatprep.subr.mxu0 0.0
    %662 = vmatpush1.msra.mxu0 0.0
    %663 = vmatprep.subr.mxu0 0.0
    %664 = vmatpush1.msra.mxu0 0.0
    %665 = vmatprep.subr.mxu0 0.0
    %666 = vmatpush1.msra.mxu0 0.0
    %667 = vmatprep.subr.mxu0 0.0
    %668 = vmatpush1.msra.mxu0 %v103
    %669 = vmatprep.subr.mxu0 0.0
    %670 = vmatpush1.msra.mxu0 %v102
    %671 = vmatprep.subr.mxu0 0.0
    %672 = vmatpush1.msra.mxu0 %v101
    %673 = vmatprep.subr.mxu0 0.0
    %674 = vmatpush1.msra.mxu0 %v100
    %675 = vmatprep.subr.mxu0 0.0
    %676 = vmatpush2.msra.mxu0 0.0
    %677 = vmatprep.subr.mxu0 0.0
    %678 = vmatpush2.msra.mxu0 0.0
    %679 = vmatprep.subr.mxu0 0.0
    %680 = vmatpush2.msra.mxu0 0.0
    %681 = vmatprep.subr.mxu0 0.0
    %682 = vmatpush2.msra.mxu0 0.0
    %683 = vmatprep.subr.mxu0 0.0
    %684 = vmatpush2.msra.mxu0 0.0
    %685 = vmatprep.subr.mxu0 0.0
    %686 = vmatpush2.msra.mxu0 0.0
    %687 = vmatprep.subr.mxu0 0.0
    %688 = vmatpush2.msra.mxu0 0.0
    %689 = vmatprep.subr.mxu0 0.0
    %690 = vmatpush2.msra.mxu0 0.0
    %691 = vmatprep.subr.mxu0 0.0
    %692 = vmatpush2.msra.mxu0 0.0
    %693 = vmatprep.subr.mxu0 0.0
    %694 = vmatpush2.msra.mxu0 0.0
    %695 = vmatprep.subr.mxu0 0.0
    %696 = vmatpush2.msra.mxu0 0.0
    %697 = vmatprep.subr.mxu0 0.0
    %698 = vmatpush2.msra.mxu0 0.0
    %699 = vmatprep.subr.mxu0 0.0
    %700 = vmatpush2.msra.mxu0 0.0
    %701 = vmatprep.subr.mxu0 0.0
    %702 = vmatpush2.msra.mxu0 0.0
    %703 = vmatprep.subr.mxu0 0.0
    %704 = vmatpush2.msra.mxu0 0.0
    %705 = vmatprep.subr.mxu0 0.0
    %706 = vmatpush2.msra.mxu0 0.0
    %707 = vmatprep.mubr.f32.mxu0 0.0
    %708 = vmatmul.mubr.f32.gmra.mxu0 %v641
    %v709 = vpop.f32.mrf.mxu0
    %v710 = vadd.f32 0.0, %v709
    %v711 = vpop.f32.mrf.mxu0
    %712 = vdwg.mxu0
    %v714 = vrot.slane %v710, 4
    %v716 = vadd.f32 %v207, %v714
    %v717 = vxor.u32 %v716, 2147483648
    %v718 = vmul.f32 %v717, 1.442695
    %v719 = vpow.pop %v718
    %v720 = vadd.f32 %v719, 1.0
    %v721 = vrcp.pop %v720
    %v722 = vmul.f32 1.0, %v721
    %v723 = vtanh.pop %v716
    %v725 = vrot.slane %v519, 6
    %v727 = vmul.f32 %v722, %v725
    %729 = vrot.lane.b32.xlu0 %v723, 64
    %v730 = vpop.permute.xlu0 %729
    %v732 = vmul.f32 %v722, %v730
    %734 = vrot.lane.b32.xlu0 %v732, 32
    %v735 = vpop.permute.xlu0 %734
    %v737 = vadd.f32 %v727, %v735
    %v738 = vtanh.pop %v737
    %740 = vrot.lane.b32.xlu0 %v738, 64
    %v741 = vpop.permute.xlu0 %740
    %v743 = vmul.f32 %v722, %v741
    %745 = vrot.lane.b32.xlu0 %v743, 32
    %v746 = vpop.permute.xlu0 %745
    %v748 = vrot.slane %v632, 4
    %749 = vrot.lane.b32.xlu0 %v748, 64
    %v750 = vpop.permute.xlu0 %749
    %v752 = vsel %vm215, %v746, %v750
    %v754 = vrot.slane %v752, 4
    %v755 = vsel %vm319, %v754, 0
    %757 = vmatprep.subr.mxu0 0.0
    %758 = vmatpush1.msra.mxu0 0.0
    %759 = vmatprep.subr.mxu0 0.0
    %760 = vmatpush1.msra.mxu0 0.0
    %761 = vmatprep.subr.mxu0 0.0
    %762 = vmatpush1.msra.mxu0 0.0
    %763 = vmatprep.subr.mxu0 0.0
    %764 = vmatpush1.msra.mxu0 0.0
    %765 = vmatprep.subr.mxu0 0.0
    %766 = vmatpush1.msra.mxu0 0.0
    %767 = vmatprep.subr.mxu0 0.0
    %768 = vmatpush1.msra.mxu0 0.0
    %769 = vmatprep.subr.mxu0 0.0
    %770 = vmatpush1.msra.mxu0 0.0
    %771 = vmatprep.subr.mxu0 0.0
    %772 = vmatpush1.msra.mxu0 0.0
    %773 = vmatprep.subr.mxu0 0.0
    %774 = vmatpush1.msra.mxu0 %v111
    %775 = vmatprep.subr.mxu0 0.0
    %776 = vmatpush1.msra.mxu0 %v110
    %777 = vmatprep.subr.mxu0 0.0
    %778 = vmatpush1.msra.mxu0 %v109
    %779 = vmatprep.subr.mxu0 0.0
    %780 = vmatpush1.msra.mxu0 %v108
    %781 = vmatprep.subr.mxu0 0.0
    %782 = vmatpush1.msra.mxu0 %v107
    %783 = vmatprep.subr.mxu0 0.0
    %784 = vmatpush1.msra.mxu0 %v106
    %785 = vmatprep.subr.mxu0 0.0
    %786 = vmatpush1.msra.mxu0 %v105
    %787 = vmatprep.subr.mxu0 0.0
    %788 = vmatpush1.msra.mxu0 %v104
    %789 = vmatprep.subr.mxu0 0.0
    %790 = vmatpush2.msra.mxu0 0.0
    %791 = vmatprep.subr.mxu0 0.0
    %792 = vmatpush2.msra.mxu0 0.0
    %793 = vmatprep.subr.mxu0 0.0
    %794 = vmatpush2.msra.mxu0 0.0
    %795 = vmatprep.subr.mxu0 0.0
    %796 = vmatpush2.msra.mxu0 0.0
    %797 = vmatprep.subr.mxu0 0.0
    %798 = vmatpush2.msra.mxu0 0.0
    %799 = vmatprep.subr.mxu0 0.0
    %800 = vmatpush2.msra.mxu0 0.0
    %801 = vmatprep.subr.mxu0 0.0
    %802 = vmatpush2.msra.mxu0 0.0
    %803 = vmatprep.subr.mxu0 0.0
    %804 = vmatpush2.msra.mxu0 0.0
    %805 = vmatprep.subr.mxu0 0.0
    %806 = vmatpush2.msra.mxu0 0.0
    %807 = vmatprep.subr.mxu0 0.0
    %808 = vmatpush2.msra.mxu0 0.0
    %809 = vmatprep.subr.mxu0 0.0
    %810 = vmatpush2.msra.mxu0 0.0
    %811 = vmatprep.subr.mxu0 0.0
    %812 = vmatpush2.msra.mxu0 0.0
    %813 = vmatprep.subr.mxu0 0.0
    %814 = vmatpush2.msra.mxu0 0.0
    %815 = vmatprep.subr.mxu0 0.0
    %816 = vmatpush2.msra.mxu0 0.0
    %817 = vmatprep.subr.mxu0 0.0
    %818 = vmatpush2.msra.mxu0 0.0
    %819 = vmatprep.subr.mxu0 0.0
    %820 = vmatpush2.msra.mxu0 0.0
    %821 = vmatprep.mubr.f32.mxu0 0.0
    %822 = vmatmul.mubr.f32.gmra.mxu0 %v755
    %v823 = vpop.f32.mrf.mxu0
    %v824 = vadd.f32 %v117, %v823
    %v825 = vpop.f32.mrf.mxu0
    %826 = vdwg.mxu0
    %v827 = vxor.u32 %v824, 2147483648
    %v828 = vmul.f32 %v827, 1.442695
    %v829 = vpow.pop %v828
    %v830 = vadd.f32 %v829, 1.0
    %v831 = vrcp.pop %v830
    %v832 = vmul.f32 1.0, %v831
    %v833 = vtanh.pop %v824
    %v834 = vmul.f32 %v832, %v626
    %836 = vrot.lane.b32.xlu0 %v833, 64
    %v837 = vpop.permute.xlu0 %836
    %v839 = vmul.f32 %v832, %v837
    %841 = vrot.lane.b32.xlu0 %v839, 32
    %v842 = vpop.permute.xlu0 %841
    %v844 = vadd.f32 %v834, %v842
    %v845 = vtanh.pop %v844
    %847 = vrot.lane.b32.xlu0 %v845, 64
    %v848 = vpop.permute.xlu0 %847
    %v850 = vmul.f32 %v832, %v848
    %852 = vrot.lane.b32.xlu0 %v850, 32
    %v853 = vpop.permute.xlu0 %852
    %855 = vst.msk [vmem:[#allocation2 + $0x4] sm:$0x3] %vm421, %v853
    %v856 = vrot.slane %v743, 4
    %857 = vrot.lane.b32.xlu0 %v856, 32
    %v858 = vpop.permute.xlu0 %857
    %v859 = vsel %vm215, %v858, 0
    %861 = vmatprep.subr.mxu0 0.0
    %862 = vmatpush1.msra.mxu0 0.0
    %863 = vmatprep.subr.mxu0 0.0
    %864 = vmatpush1.msra.mxu0 0.0
    %865 = vmatprep.subr.mxu0 0.0
    %866 = vmatpush1.msra.mxu0 0.0
    %867 = vmatprep.subr.mxu0 0.0
    %868 = vmatpush1.msra.mxu0 0.0
    %869 = vmatprep.subr.mxu0 0.0
    %870 = vmatpush1.msra.mxu0 0.0
    %871 = vmatprep.subr.mxu0 0.0
    %872 = vmatpush1.msra.mxu0 0.0
    %873 = vmatprep.subr.mxu0 0.0
    %874 = vmatpush1.msra.mxu0 0.0
    %875 = vmatprep.subr.mxu0 0.0
    %876 = vmatpush1.msra.mxu0 0.0
    %877 = vmatprep.subr.mxu0 0.0
    %878 = vmatpush1.msra.mxu0 0.0
    %879 = vmatprep.subr.mxu0 0.0
    %880 = vmatpush1.msra.mxu0 0.0
    %881 = vmatprep.subr.mxu0 0.0
    %882 = vmatpush1.msra.mxu0 0.0
    %883 = vmatprep.subr.mxu0 0.0
    %884 = vmatpush1.msra.mxu0 0.0
    %885 = vmatprep.subr.mxu0 0.0
    %886 = vmatpush1.msra.mxu0 %v103
    %887 = vmatprep.subr.mxu0 0.0
    %888 = vmatpush1.msra.mxu0 %v102
    %889 = vmatprep.subr.mxu0 0.0
    %890 = vmatpush1.msra.mxu0 %v101
    %891 = vmatprep.subr.mxu0 0.0
    %892 = vmatpush1.msra.mxu0 %v100
    %893 = vmatprep.subr.mxu0 0.0
    %894 = vmatpush2.msra.mxu0 0.0
    %895 = vmatprep.subr.mxu0 0.0
    %896 = vmatpush2.msra.mxu0 0.0
    %897 = vmatprep.subr.mxu0 0.0
    %898 = vmatpush2.msra.mxu0 0.0
    %899 = vmatprep.subr.mxu0 0.0
    %900 = vmatpush2.msra.mxu0 0.0
    %901 = vmatprep.subr.mxu0 0.0
    %902 = vmatpush2.msra.mxu0 0.0
    %903 = vmatprep.subr.mxu0 0.0
    %904 = vmatpush2.msra.mxu0 0.0
    %905 = vmatprep.subr.mxu0 0.0
    %906 = vmatpush2.msra.mxu0 0.0
    %907 = vmatprep.subr.mxu0 0.0
    %908 = vmatpush2.msra.mxu0 0.0
    %909 = vmatprep.subr.mxu0 0.0
    %910 = vmatpush2.msra.mxu0 0.0
    %911 = vmatprep.subr.mxu0 0.0
    %912 = vmatpush2.msra.mxu0 0.0
    %913 = vmatprep.subr.mxu0 0.0
    %914 = vmatpush2.msra.mxu0 0.0
    %915 = vmatprep.subr.mxu0 0.0
    %916 = vmatpush2.msra.mxu0 0.0
    %917 = vmatprep.subr.mxu0 0.0
    %918 = vmatpush2.msra.mxu0 0.0
    %919 = vmatprep.subr.mxu0 0.0
    %920 = vmatpush2.msra.mxu0 0.0
    %921 = vmatprep.subr.mxu0 0.0
    %922 = vmatpush2.msra.mxu0 0.0
    %923 = vmatprep.subr.mxu0 0.0
    %924 = vmatpush2.msra.mxu0 0.0
    %925 = vmatprep.mubr.f32.mxu0 0.0
    %926 = vmatmul.mubr.f32.gmra.mxu0 %v859
    %v927 = vpop.f32.mrf.mxu0
    %v928 = vadd.f32 0.0, %v927
    %v929 = vpop.f32.mrf.mxu0
    %930 = vdwg.mxu0
    %v932 = vrot.slane %v928, 2
    %v934 = vadd.f32 %v207, %v932
    %v935 = vxor.u32 %v934, 2147483648
    %v936 = vmul.f32 %v935, 1.442695
    %v937 = vpow.pop %v936
    %v938 = vadd.f32 %v937, 1.0
    %v939 = vrcp.pop %v938
    %v940 = vmul.f32 1.0, %v939
    %v941 = vtanh.pop %v934
    %v943 = vrot.slane %v737, 6
    %v945 = vmul.f32 %v940, %v943
    %947 = vrot.lane.b32.xlu0 %v941, 64
    %v948 = vpop.permute.xlu0 %947
    %v950 = vmul.f32 %v940, %v948
    %952 = vrot.lane.b32.xlu0 %v950, 32
    %v953 = vpop.permute.xlu0 %952
    %v955 = vadd.f32 %v945, %v953
    %v956 = vtanh.pop %v955
    %958 = vrot.lane.b32.xlu0 %v956, 64
    %v959 = vpop.permute.xlu0 %958
    %v961 = vmul.f32 %v940, %v959
    %963 = vrot.lane.b32.xlu0 %v961, 32
    %v964 = vpop.permute.xlu0 %963
    %v966 = vrot.slane %v850, 2
    %967 = vrot.lane.b32.xlu0 %v966, 64
    %v968 = vpop.permute.xlu0 %967
    %v970 = vsel %vm215, %v964, %v968
    %v972 = vrot.slane %v970, 6
    %v973 = vsel %vm319, %v972, 0
    %975 = vmatprep.subr.mxu0 0.0
    %976 = vmatpush1.msra.mxu0 0.0
    %977 = vmatprep.subr.mxu0 0.0
    %978 = vmatpush1.msra.mxu0 0.0
    %979 = vmatprep.subr.mxu0 0.0
    %980 = vmatpush1.msra.mxu0 0.0
    %981 = vmatprep.subr.mxu0 0.0
    %982 = vmatpush1.msra.mxu0 0.0
    %983 = vmatprep.subr.mxu0 0.0
    %984 = vmatpush1.msra.mxu0 0.0
    %985 = vmatprep.subr.mxu0 0.0
    %986 = vmatpush1.msra.mxu0 0.0
    %987 = vmatprep.subr.mxu0 0.0
    %988 = vmatpush1.msra.mxu0 0.0
    %989 = vmatprep.subr.mxu0 0.0
    %990 = vmatpush1.msra.mxu0 0.0
    %991 = vmatprep.subr.mxu0 0.0
    %992 = vmatpush1.msra.mxu0 %v111
    %993 = vmatprep.subr.mxu0 0.0
    %994 = vmatpush1.msra.mxu0 %v110
    %995 = vmatprep.subr.mxu0 0.0
    %996 = vmatpush1.msra.mxu0 %v109
    %997 = vmatprep.subr.mxu0 0.0
    %998 = vmatpush1.msra.mxu0 %v108
    %999 = vmatprep.subr.mxu0 0.0
    %1000 = vmatpush1.msra.mxu0 %v107
    %1001 = vmatprep.subr.mxu0 0.0
    %1002 = vmatpush1.msra.mxu0 %v106
    %1003 = vmatprep.subr.mxu0 0.0
    %1004 = vmatpush1.msra.mxu0 %v105
    %1005 = vmatprep.subr.mxu0 0.0
    %1006 = vmatpush1.msra.mxu0 %v104
    %1007 = vmatprep.subr.mxu0 0.0
    %1008 = vmatpush2.msra.mxu0 0.0
    %1009 = vmatprep.subr.mxu0 0.0
    %1010 = vmatpush2.msra.mxu0 0.0
    %1011 = vmatprep.subr.mxu0 0.0
    %1012 = vmatpush2.msra.mxu0 0.0
    %1013 = vmatprep.subr.mxu0 0.0
    %1014 = vmatpush2.msra.mxu0 0.0
    %1015 = vmatprep.subr.mxu0 0.0
    %1016 = vmatpush2.msra.mxu0 0.0
    %1017 = vmatprep.subr.mxu0 0.0
    %1018 = vmatpush2.msra.mxu0 0.0
    %1019 = vmatprep.subr.mxu0 0.0
    %1020 = vmatpush2.msra.mxu0 0.0
    %1021 = vmatprep.subr.mxu0 0.0
    %1022 = vmatpush2.msra.mxu0 0.0
    %1023 = vmatprep.subr.mxu0 0.0
    %1024 = vmatpush2.msra.mxu0 0.0
    %1025 = vmatprep.subr.mxu0 0.0
    %1026 = vmatpush2.msra.mxu0 0.0
    %1027 = vmatprep.subr.mxu0 0.0
    %1028 = vmatpush2.msra.mxu0 0.0
    %1029 = vmatprep.subr.mxu0 0.0
    %1030 = vmatpush2.msra.mxu0 0.0
    %1031 = vmatprep.subr.mxu0 0.0
    %1032 = vmatpush2.msra.mxu0 0.0
    %1033 = vmatprep.subr.mxu0 0.0
    %1034 = vmatpush2.msra.mxu0 0.0
    %1035 = vmatprep.subr.mxu0 0.0
    %1036 = vmatpush2.msra.mxu0 0.0
    %1037 = vmatprep.subr.mxu0 0.0
    %1038 = vmatpush2.msra.mxu0 0.0
    %1039 = vmatprep.mubr.f32.mxu0 0.0
    %1040 = vmatmul.mubr.f32.gmra.mxu0 %v973
    %v1041 = vpop.f32.mrf.mxu0
    %v1042 = vadd.f32 %v117, %v1041
    %v1043 = vpop.f32.mrf.mxu0
    %1044 = vdwg.mxu0
    %v1045 = vxor.u32 %v1042, 2147483648
    %v1046 = vmul.f32 %v1045, 1.442695
    %v1047 = vpow.pop %v1046
    %v1048 = vadd.f32 %v1047, 1.0
    %v1049 = vrcp.pop %v1048
    %v1050 = vmul.f32 1.0, %v1049
    %v1051 = vtanh.pop %v1042
    %v1052 = vmul.f32 %v1050, %v844
    %1054 = vrot.lane.b32.xlu0 %v1051, 64
    %v1055 = vpop.permute.xlu0 %1054
    %v1057 = vmul.f32 %v1050, %v1055
    %1059 = vrot.lane.b32.xlu0 %v1057, 32
    %v1060 = vpop.permute.xlu0 %1059
    %v1062 = vadd.f32 %v1052, %v1060
    %v1063 = vtanh.pop %v1062
    %1065 = vrot.lane.b32.xlu0 %v1063, 64
    %v1066 = vpop.permute.xlu0 %1065
    %v1068 = vmul.f32 %v1050, %v1066
    %1070 = vrot.lane.b32.xlu0 %v1068, 32
    %v1071 = vpop.permute.xlu0 %1070
    %1073 = vst.msk [vmem:[#allocation2 + $0x6] sm:$0x3] %vm421, %v1071
    %v1074 = vrot.slane %v961, 6
    %1075 = vrot.lane.b32.xlu0 %v1074, 32
    %v1076 = vpop.permute.xlu0 %1075
    %v1077 = vsel %vm215, %v1076, 0
    %1079 = vmatprep.subr.mxu0 0.0
    %1080 = vmatpush1.msra.mxu0 0.0
    %1081 = vmatprep.subr.mxu0 0.0
    %1082 = vmatpush1.msra.mxu0 0.0
    %1083 = vmatprep.subr.mxu0 0.0
    %1084 = vmatpush1.msra.mxu0 0.0
    %1085 = vmatprep.subr.mxu0 0.0
    %1086 = vmatpush1.msra.mxu0 0.0
    %1087 = vmatprep.subr.mxu0 0.0
    %1088 = vmatpush1.msra.mxu0 0.0
    %1089 = vmatprep.subr.mxu0 0.0
    %1090 = vmatpush1.msra.mxu0 0.0
    %1091 = vmatprep.subr.mxu0 0.0
    %1092 = vmatpush1.msra.mxu0 0.0
    %1093 = vmatprep.subr.mxu0 0.0
    %1094 = vmatpush1.msra.mxu0 0.0
    %1095 = vmatprep.subr.mxu0 0.0
    %1096 = vmatpush1.msra.mxu0 0.0
    %1097 = vmatprep.subr.mxu0 0.0
    %1098 = vmatpush1.msra.mxu0 0.0
    %1099 = vmatprep.subr.mxu0 0.0
    %1100 = vmatpush1.msra.mxu0 0.0
    %1101 = vmatprep.subr.mxu0 0.0
    %1102 = vmatpush1.msra.mxu0 0.0
    %1103 = vmatprep.subr.mxu0 0.0
    %1104 = vmatpush1.msra.mxu0 %v103
    %1105 = vmatprep.subr.mxu0 0.0
    %1106 = vmatpush1.msra.mxu0 %v102
    %1107 = vmatprep.subr.mxu0 0.0
    %1108 = vmatpush1.msra.mxu0 %v101
    %1109 = vmatprep.subr.mxu0 0.0
    %1110 = vmatpush1.msra.mxu0 %v100
    %1111 = vmatprep.subr.mxu0 0.0
    %1112 = vmatpush2.msra.mxu0 0.0
    %1113 = vmatprep.subr.mxu0 0.0
    %1114 = vmatpush2.msra.mxu0 0.0
    %1115 = vmatprep.subr.mxu0 0.0
    %1116 = vmatpush2.msra.mxu0 0.0
    %1117 = vmatprep.subr.mxu0 0.0
    %1118 = vmatpush2.msra.mxu0 0.0
    %1119 = vmatprep.subr.mxu0 0.0
    %1120 = vmatpush2.msra.mxu0 0.0
    %1121 = vmatprep.subr.mxu0 0.0
    %1122 = vmatpush2.msra.mxu0 0.0
    %1123 = vmatprep.subr.mxu0 0.0
    %1124 = vmatpush2.msra.mxu0 0.0
    %1125 = vmatprep.subr.mxu0 0.0
    %1126 = vmatpush2.msra.mxu0 0.0
    %1127 = vmatprep.subr.mxu0 0.0
    %1128 = vmatpush2.msra.mxu0 0.0
    %1129 = vmatprep.subr.mxu0 0.0
    %1130 = vmatpush2.msra.mxu0 0.0
    %1131 = vmatprep.subr.mxu0 0.0
    %1132 = vmatpush2.msra.mxu0 0.0
    %1133 = vmatprep.subr.mxu0 0.0
    %1134 = vmatpush2.msra.mxu0 0.0
    %1135 = vmatprep.subr.mxu0 0.0
    %1136 = vmatpush2.msra.mxu0 0.0
    %1137 = vmatprep.subr.mxu0 0.0
    %1138 = vmatpush2.msra.mxu0 0.0
    %1139 = vmatprep.subr.mxu0 0.0
    %1140 = vmatpush2.msra.mxu0 0.0
    %1141 = vmatprep.subr.mxu0 0.0
    %1142 = vmatpush2.msra.mxu0 0.0
    %1143 = vmatprep.mubr.f32.mxu0 0.0
    %1144 = vmatmul.mubr.f32.gmra.mxu0 %v1077
    %v1145 = vpop.f32.mrf.mxu0
    %v1146 = vadd.f32 0.0, %v1145
    %v1147 = vpop.f32.mrf.mxu0
    %1148 = vdwg.mxu0
    %v1149 = vadd.f32 %v212, %v1146
    %v1150 = vxor.u32 %v1149, 2147483648
    %v1151 = vmul.f32 %v1150, 1.442695
    %v1152 = vpow.pop %v1151
    %v1153 = vadd.f32 %v1152, 1.0
    %v1154 = vrcp.pop %v1153
    %v1155 = vmul.f32 1.0, %v1154
    %v1156 = vtanh.pop %v1149
    %v1158 = vrot.slane %v955, 6
    %v1160 = vmul.f32 %v1155, %v1158
    %1162 = vrot.lane.b32.xlu0 %v1156, 64
    %v1163 = vpop.permute.xlu0 %1162
    %v1165 = vmul.f32 %v1155, %v1163
    %1167 = vrot.lane.b32.xlu0 %v1165, 32
    %v1168 = vpop.permute.xlu0 %1167
    %v1170 = vadd.f32 %v1160, %v1168
    %v1171 = vtanh.pop %v1170
    %1173 = vrot.lane.b32.xlu0 %v1171, 64
    %v1174 = vpop.permute.xlu0 %1173
    %v1176 = vmul.f32 %v1155, %v1174
    %1178 = vrot.lane.b32.xlu0 %v1176, 32
    %v1179 = vpop.permute.xlu0 %1178
    %1181 = vrot.lane.b32.xlu0 %v1068, 64
    %v1182 = vpop.permute.xlu0 %1181
    %v1184 = vsel %vm215, %v1179, %v1182
    %v1186 = vsel %vm319, %v1184, 0
    %1188 = vmatprep.subr.mxu0 0.0
    %1189 = vmatpush1.msra.mxu0 0.0
    %1190 = vmatprep.subr.mxu0 0.0
    %1191 = vmatpush1.msra.mxu0 0.0
    %1192 = vmatprep.subr.mxu0 0.0
    %1193 = vmatpush1.msra.mxu0 0.0
    %1194 = vmatprep.subr.mxu0 0.0
    %1195 = vmatpush1.msra.mxu0 0.0
    %1196 = vmatprep.subr.mxu0 0.0
    %1197 = vmatpush1.msra.mxu0 0.0
    %1198 = vmatprep.subr.mxu0 0.0
    %1199 = vmatpush1.msra.mxu0 0.0
    %1200 = vmatprep.subr.mxu0 0.0
    %1201 = vmatpush1.msra.mxu0 0.0
    %1202 = vmatprep.subr.mxu0 0.0
    %1203 = vmatpush1.msra.mxu0 0.0
    %1204 = vmatprep.subr.mxu0 0.0
    %1205 = vmatpush1.msra.mxu0 %v111
    %1206 = vmatprep.subr.mxu0 0.0
    %1207 = vmatpush1.msra.mxu0 %v110
    %1208 = vmatprep.subr.mxu0 0.0
    %1209 = vmatpush1.msra.mxu0 %v109
    %1210 = vmatprep.subr.mxu0 0.0
    %1211 = vmatpush1.msra.mxu0 %v108
    %1212 = vmatprep.subr.mxu0 0.0
    %1213 = vmatpush1.msra.mxu0 %v107
    %1214 = vmatprep.subr.mxu0 0.0
    %1215 = vmatpush1.msra.mxu0 %v106
    %1216 = vmatprep.subr.mxu0 0.0
    %1217 = vmatpush1.msra.mxu0 %v105
    %1218 = vmatprep.subr.mxu0 0.0
    %1219 = vmatpush1.msra.mxu0 %v104
    %1220 = vmatprep.subr.mxu0 0.0
    %1221 = vmatpush2.msra.mxu0 0.0
    %1222 = vmatprep.subr.mxu0 0.0
    %1223 = vmatpush2.msra.mxu0 0.0
    %1224 = vmatprep.subr.mxu0 0.0
    %1225 = vmatpush2.msra.mxu0 0.0
    %1226 = vmatprep.subr.mxu0 0.0
    %1227 = vmatpush2.msra.mxu0 0.0
    %1228 = vmatprep.subr.mxu0 0.0
    %1229 = vmatpush2.msra.mxu0 0.0
    %1230 = vmatprep.subr.mxu0 0.0
    %1231 = vmatpush2.msra.mxu0 0.0
    %1232 = vmatprep.subr.mxu0 0.0
    %1233 = vmatpush2.msra.mxu0 0.0
    %1234 = vmatprep.subr.mxu0 0.0
    %1235 = vmatpush2.msra.mxu0 0.0
    %1236 = vmatprep.subr.mxu0 0.0
    %1237 = vmatpush2.msra.mxu0 0.0
    %1238 = vmatprep.subr.mxu0 0.0
    %1239 = vmatpush2.msra.mxu0 0.0
    %1240 = vmatprep.subr.mxu0 0.0
    %1241 = vmatpush2.msra.mxu0 0.0
    %1242 = vmatprep.subr.mxu0 0.0
    %1243 = vmatpush2.msra.mxu0 0.0
    %1244 = vmatprep.subr.mxu0 0.0
    %1245 = vmatpush2.msra.mxu0 0.0
    %1246 = vmatprep.subr.mxu0 0.0
    %1247 = vmatpush2.msra.mxu0 0.0
    %1248 = vmatprep.subr.mxu0 0.0
    %1249 = vmatpush2.msra.mxu0 0.0
    %1250 = vmatprep.subr.mxu0 0.0
    %1251 = vmatpush2.msra.mxu0 0.0
    %1252 = vmatprep.mubr.f32.mxu0 0.0
    %1253 = vmatmul.mubr.f32.gmra.mxu0 %v1186
    %v1254 = vpop.f32.mrf.mxu0
    %v1255 = vadd.f32 %v117, %v1254
    %v1256 = vpop.f32.mrf.mxu0
    %1257 = vdwg.mxu0
    %v1258 = vxor.u32 %v1255, 2147483648
    %v1259 = vmul.f32 %v1258, 1.442695
    %v1260 = vpow.pop %v1259
    %v1261 = vadd.f32 %v1260, 1.0
    %v1262 = vrcp.pop %v1261
    %v1263 = vmul.f32 1.0, %v1262
    %v1264 = vtanh.pop %v1255
    %v1265 = vmul.f32 %v1263, %v1062
    %1267 = vrot.lane.b32.xlu0 %v1264, 64
    %v1268 = vpop.permute.xlu0 %1267
    %v1270 = vmul.f32 %v1263, %v1268
    %1272 = vrot.lane.b32.xlu0 %v1270, 32
    %v1273 = vpop.permute.xlu0 %1272
    %v1275 = vadd.f32 %v1265, %v1273
    %v1276 = vtanh.pop %v1275
    %1278 = vrot.lane.b32.xlu0 %v1276, 64
    %v1279 = vpop.permute.xlu0 %1278
    %v1281 = vmul.f32 %v1263, %v1279
    %1283 = vrot.lane.b32.xlu0 %v1281, 32
    %v1284 = vpop.permute.xlu0 %1283
    %1286 = vst.msk [vmem:[#allocation2 + $0x8] sm:$0x3] %vm421, %v1284
    %v1287 = vsel %vm215, %v1179, 0
    %1289 = vmatprep.subr.mxu0 0.0
    %1290 = vmatpush1.msra.mxu0 0.0
    %1291 = vmatprep.subr.mxu0 0.0
    %1292 = vmatpush1.msra.mxu0 0.0
    %1293 = vmatprep.subr.mxu0 0.0
    %1294 = vmatpush1.msra.mxu0 0.0
    %1295 = vmatprep.subr.mxu0 0.0
    %1296 = vmatpush1.msra.mxu0 0.0
    %1297 = vmatprep.subr.mxu0 0.0
    %1298 = vmatpush1.msra.mxu0 0.0
    %1299 = vmatprep.subr.mxu0 0.0
    %1300 = vmatpush1.msra.mxu0 0.0
    %1301 = vmatprep.subr.mxu0 0.0
    %1302 = vmatpush1.msra.mxu0 0.0
    %1303 = vmatprep.subr.mxu0 0.0
    %1304 = vmatpush1.msra.mxu0 0.0
    %1305 = vmatprep.subr.mxu0 0.0
    %1306 = vmatpush1.msra.mxu0 0.0
    %1307 = vmatprep.subr.mxu0 0.0
    %1308 = vmatpush1.msra.mxu0 0.0
    %1309 = vmatprep.subr.mxu0 0.0
    %1310 = vmatpush1.msra.mxu0 0.0
    %1311 = vmatprep.subr.mxu0 0.0
    %1312 = vmatpush1.msra.mxu0 0.0
    %1313 = vmatprep.subr.mxu0 0.0
    %1314 = vmatpush1.msra.mxu0 %v103
    %1315 = vmatprep.subr.mxu0 0.0
    %1316 = vmatpush1.msra.mxu0 %v102
    %1317 = vmatprep.subr.mxu0 0.0
    %1318 = vmatpush1.msra.mxu0 %v101
    %1319 = vmatprep.subr.mxu0 0.0
    %1320 = vmatpush1.msra.mxu0 %v100
    %1321 = vmatprep.subr.mxu0 0.0
    %1322 = vmatpush2.msra.mxu0 0.0
    %1323 = vmatprep.subr.mxu0 0.0
    %1324 = vmatpush2.msra.mxu0 0.0
    %1325 = vmatprep.subr.mxu0 0.0
    %1326 = vmatpush2.msra.mxu0 0.0
    %1327 = vmatprep.subr.mxu0 0.0
    %1328 = vmatpush2.msra.mxu0 0.0
    %1329 = vmatprep.subr.mxu0 0.0
    %1330 = vmatpush2.msra.mxu0 0.0
    %1331 = vmatprep.subr.mxu0 0.0
    %1332 = vmatpush2.msra.mxu0 0.0
    %1333 = vmatprep.subr.mxu0 0.0
    %1334 = vmatpush2.msra.mxu0 0.0
    %1335 = vmatprep.subr.mxu0 0.0
    %1336 = vmatpush2.msra.mxu0 0.0
    %1337 = vmatprep.subr.mxu0 0.0
    %1338 = vmatpush2.msra.mxu0 0.0
    %1339 = vmatprep.subr.mxu0 0.0
    %1340 = vmatpush2.msra.mxu0 0.0
    %1341 = vmatprep.subr.mxu0 0.0
    %1342 = vmatpush2.msra.mxu0 0.0
    %1343 = vmatprep.subr.mxu0 0.0
    %1344 = vmatpush2.msra.mxu0 0.0
    %1345 = vmatprep.subr.mxu0 0.0
    %1346 = vmatpush2.msra.mxu0 0.0
    %1347 = vmatprep.subr.mxu0 0.0
    %1348 = vmatpush2.msra.mxu0 0.0
    %1349 = vmatprep.subr.mxu0 0.0
    %1350 = vmatpush2.msra.mxu0 0.0
    %1351 = vmatprep.subr.mxu0 0.0
    %1352 = vmatpush2.msra.mxu0 0.0
    %1353 = vmatprep.mubr.f32.mxu0 0.0
    %1354 = vmatmul.mubr.f32.gmra.mxu0 %v1287
    %v1355 = vpop.f32.mrf.mxu0
    %v1356 = vadd.f32 0.0, %v1355
    %v1357 = vpop.f32.mrf.mxu0
    %1358 = vdwg.mxu0
    %v1360 = vrot.slane %v1356, 6
    %v1362 = vadd.f32 %v212, %v1360
    %v1363 = vxor.u32 %v1362, 2147483648
    %v1364 = vmul.f32 %v1363, 1.442695
    %v1365 = vpow.pop %v1364
    %v1366 = vadd.f32 %v1365, 1.0
    %v1367 = vrcp.pop %v1366
    %v1368 = vmul.f32 1.0, %v1367
    %v1369 = vtanh.pop %v1362
    %v1371 = vrot.slane %v1170, 6
    %v1373 = vmul.f32 %v1368, %v1371
    %1375 = vrot.lane.b32.xlu0 %v1369, 64
    %v1376 = vpop.permute.xlu0 %1375
    %v1378 = vmul.f32 %v1368, %v1376
    %1380 = vrot.lane.b32.xlu0 %v1378, 32
    %v1381 = vpop.permute.xlu0 %1380
    %v1383 = vadd.f32 %v1373, %v1381
    %v1384 = vtanh.pop %v1383
    %1386 = vrot.lane.b32.xlu0 %v1384, 64
    %v1387 = vpop.permute.xlu0 %1386
    %v1389 = vmul.f32 %v1368, %v1387
    %1391 = vrot.lane.b32.xlu0 %v1389, 32
    %v1392 = vpop.permute.xlu0 %1391
    %v1394 = vrot.slane %v1281, 6
    %1395 = vrot.lane.b32.xlu0 %v1394, 64
    %v1396 = vpop.permute.xlu0 %1395
    %v1398 = vsel %vm215, %v1392, %v1396
    %v1400 = vrot.slane %v1398, 2
    %v1401 = vsel %vm319, %v1400, 0
    %1403 = vmatprep.subr.mxu0 0.0
    %1404 = vmatpush1.msra.mxu0 0.0
    %1405 = vmatprep.subr.mxu0 0.0
    %1406 = vmatpush1.msra.mxu0 0.0
    %1407 = vmatprep.subr.mxu0 0.0
    %1408 = vmatpush1.msra.mxu0 0.0
    %1409 = vmatprep.subr.mxu0 0.0
    %1410 = vmatpush1.msra.mxu0 0.0
    %1411 = vmatprep.subr.mxu0 0.0
    %1412 = vmatpush1.msra.mxu0 0.0
    %1413 = vmatprep.subr.mxu0 0.0
    %1414 = vmatpush1.msra.mxu0 0.0
    %1415 = vmatprep.subr.mxu0 0.0
    %1416 = vmatpush1.msra.mxu0 0.0
    %1417 = vmatprep.subr.mxu0 0.0
    %1418 = vmatpush1.msra.mxu0 0.0
    %1419 = vmatprep.subr.mxu0 0.0
    %1420 = vmatpush1.msra.mxu0 %v111
    %1421 = vmatprep.subr.mxu0 0.0
    %1422 = vmatpush1.msra.mxu0 %v110
    %1423 = vmatprep.subr.mxu0 0.0
    %1424 = vmatpush1.msra.mxu0 %v109
    %1425 = vmatprep.subr.mxu0 0.0
    %1426 = vmatpush1.msra.mxu0 %v108
    %1427 = vmatprep.subr.mxu0 0.0
    %1428 = vmatpush1.msra.mxu0 %v107
    %1429 = vmatprep.subr.mxu0 0.0
    %1430 = vmatpush1.msra.mxu0 %v106
    %1431 = vmatprep.subr.mxu0 0.0
    %1432 = vmatpush1.msra.mxu0 %v105
    %1433 = vmatprep.subr.mxu0 0.0
    %1434 = vmatpush1.msra.mxu0 %v104
    %1435 = vmatprep.subr.mxu0 0.0
    %1436 = vmatpush2.msra.mxu0 0.0
    %1437 = vmatprep.subr.mxu0 0.0
    %1438 = vmatpush2.msra.mxu0 0.0
    %1439 = vmatprep.subr.mxu0 0.0
    %1440 = vmatpush2.msra.mxu0 0.0
    %1441 = vmatprep.subr.mxu0 0.0
    %1442 = vmatpush2.msra.mxu0 0.0
    %1443 = vmatprep.subr.mxu0 0.0
    %1444 = vmatpush2.msra.mxu0 0.0
    %1445 = vmatprep.subr.mxu0 0.0
    %1446 = vmatpush2.msra.mxu0 0.0
    %1447 = vmatprep.subr.mxu0 0.0
    %1448 = vmatpush2.msra.mxu0 0.0
    %1449 = vmatprep.subr.mxu0 0.0
    %1450 = vmatpush2.msra.mxu0 0.0
    %1451 = vmatprep.subr.mxu0 0.0
    %1452 = vmatpush2.msra.mxu0 0.0
    %1453 = vmatprep.subr.mxu0 0.0
    %1454 = vmatpush2.msra.mxu0 0.0
    %1455 = vmatprep.subr.mxu0 0.0
    %1456 = vmatpush2.msra.mxu0 0.0
    %1457 = vmatprep.subr.mxu0 0.0
    %1458 = vmatpush2.msra.mxu0 0.0
    %1459 = vmatprep.subr.mxu0 0.0
    %1460 = vmatpush2.msra.mxu0 0.0
    %1461 = vmatprep.subr.mxu0 0.0
    %1462 = vmatpush2.msra.mxu0 0.0
    %1463 = vmatprep.subr.mxu0 0.0
    %1464 = vmatpush2.msra.mxu0 0.0
    %1465 = vmatprep.subr.mxu0 0.0
    %1466 = vmatpush2.msra.mxu0 0.0
    %1467 = vmatprep.mubr.f32.mxu0 0.0
    %1468 = vmatmul.mubr.f32.gmra.mxu0 %v1401
    %v1469 = vpop.f32.mrf.mxu0
    %v1470 = vadd.f32 %v117, %v1469
    %v1471 = vpop.f32.mrf.mxu0
    %1472 = vdwg.mxu0
    %v1473 = vxor.u32 %v1470, 2147483648
    %v1474 = vmul.f32 %v1473, 1.442695
    %v1475 = vpow.pop %v1474
    %v1476 = vadd.f32 %v1475, 1.0
    %v1477 = vrcp.pop %v1476
    %v1478 = vmul.f32 1.0, %v1477
    %v1479 = vtanh.pop %v1470
    %v1480 = vmul.f32 %v1478, %v1275
    %1482 = vrot.lane.b32.xlu0 %v1479, 64
    %v1483 = vpop.permute.xlu0 %1482
    %v1485 = vmul.f32 %v1478, %v1483
    %1487 = vrot.lane.b32.xlu0 %v1485, 32
    %v1488 = vpop.permute.xlu0 %1487
    %v1490 = vadd.f32 %v1480, %v1488
    %v1491 = vtanh.pop %v1490
    %1493 = vrot.lane.b32.xlu0 %v1491, 64
    %v1494 = vpop.permute.xlu0 %1493
    %v1496 = vmul.f32 %v1478, %v1494
    %1498 = vrot.lane.b32.xlu0 %v1496, 32
    %v1499 = vpop.permute.xlu0 %1498
    %1501 = vst.msk [vmem:[#allocation2 + $0xa] sm:$0x3] %vm421, %v1499
    %v1502 = vrot.slane %v1389, 2
    %1503 = vrot.lane.b32.xlu0 %v1502, 32
    %v1504 = vpop.permute.xlu0 %1503
    %v1505 = vsel %vm215, %v1504, 0
    %1507 = vmatprep.subr.mxu0 0.0
    %1508 = vmatpush1.msra.mxu0 0.0
    %1509 = vmatprep.subr.mxu0 0.0
    %1510 = vmatpush1.msra.mxu0 0.0
    %1511 = vmatprep.subr.mxu0 0.0
    %1512 = vmatpush1.msra.mxu0 0.0
    %1513 = vmatprep.subr.mxu0 0.0
    %1514 = vmatpush1.msra.mxu0 0.0
    %1515 = vmatprep.subr.mxu0 0.0
    %1516 = vmatpush1.msra.mxu0 0.0
    %1517 = vmatprep.subr.mxu0 0.0
    %1518 = vmatpush1.msra.mxu0 0.0
    %1519 = vmatprep.subr.mxu0 0.0
    %1520 = vmatpush1.msra.mxu0 0.0
    %1521 = vmatprep.subr.mxu0 0.0
    %1522 = vmatpush1.msra.mxu0 0.0
    %1523 = vmatprep.subr.mxu0 0.0
    %1524 = vmatpush1.msra.mxu0 0.0
    %1525 = vmatprep.subr.mxu0 0.0
    %1526 = vmatpush1.msra.mxu0 0.0
    %1527 = vmatprep.subr.mxu0 0.0
    %1528 = vmatpush1.msra.mxu0 0.0
    %1529 = vmatprep.subr.mxu0 0.0
    %1530 = vmatpush1.msra.mxu0 0.0
    %1531 = vmatprep.subr.mxu0 0.0
    %1532 = vmatpush1.msra.mxu0 %v103
    %1533 = vmatprep.subr.mxu0 0.0
    %1534 = vmatpush1.msra.mxu0 %v102
    %1535 = vmatprep.subr.mxu0 0.0
    %1536 = vmatpush1.msra.mxu0 %v101
    %1537 = vmatprep.subr.mxu0 0.0
    %1538 = vmatpush1.msra.mxu0 %v100
    %1539 = vmatprep.subr.mxu0 0.0
    %1540 = vmatpush2.msra.mxu0 0.0
    %1541 = vmatprep.subr.mxu0 0.0
    %1542 = vmatpush2.msra.mxu0 0.0
    %1543 = vmatprep.subr.mxu0 0.0
    %1544 = vmatpush2.msra.mxu0 0.0
    %1545 = vmatprep.subr.mxu0 0.0
    %1546 = vmatpush2.msra.mxu0 0.0
    %1547 = vmatprep.subr.mxu0 0.0
    %1548 = vmatpush2.msra.mxu0 0.0
    %1549 = vmatprep.subr.mxu0 0.0
    %1550 = vmatpush2.msra.mxu0 0.0
    %1551 = vmatprep.subr.mxu0 0.0
    %1552 = vmatpush2.msra.mxu0 0.0
    %1553 = vmatprep.subr.mxu0 0.0
    %1554 = vmatpush2.msra.mxu0 0.0
    %1555 = vmatprep.subr.mxu0 0.0
    %1556 = vmatpush2.msra.mxu0 0.0
    %1557 = vmatprep.subr.mxu0 0.0
    %1558 = vmatpush2.msra.mxu0 0.0
    %1559 = vmatprep.subr.mxu0 0.0
    %1560 = vmatpush2.msra.mxu0 0.0
    %1561 = vmatprep.subr.mxu0 0.0
    %1562 = vmatpush2.msra.mxu0 0.0
    %1563 = vmatprep.subr.mxu0 0.0
    %1564 = vmatpush2.msra.mxu0 0.0
    %1565 = vmatprep.subr.mxu0 0.0
    %1566 = vmatpush2.msra.mxu0 0.0
    %1567 = vmatprep.subr.mxu0 0.0
    %1568 = vmatpush2.msra.mxu0 0.0
    %1569 = vmatprep.subr.mxu0 0.0
    %1570 = vmatpush2.msra.mxu0 0.0
    %1571 = vmatprep.mubr.f32.mxu0 0.0
    %1572 = vmatmul.mubr.f32.gmra.mxu0 %v1505
    %v1573 = vpop.f32.mrf.mxu0
    %v1574 = vadd.f32 0.0, %v1573
    %v1575 = vpop.f32.mrf.mxu0
    %1576 = vdwg.mxu0
    %v1578 = vrot.slane %v1574, 4
    %v1580 = vadd.f32 %v212, %v1578
    %v1581 = vxor.u32 %v1580, 2147483648
    %v1582 = vmul.f32 %v1581, 1.442695
    %v1583 = vpow.pop %v1582
    %v1584 = vadd.f32 %v1583, 1.0
    %v1585 = vrcp.pop %v1584
    %v1586 = vmul.f32 1.0, %v1585
    %v1587 = vtanh.pop %v1580
    %v1589 = vrot.slane %v1383, 6
    %v1591 = vmul.f32 %v1586, %v1589
    %1593 = vrot.lane.b32.xlu0 %v1587, 64
    %v1594 = vpop.permute.xlu0 %1593
    %v1596 = vmul.f32 %v1586, %v1594
    %1598 = vrot.lane.b32.xlu0 %v1596, 32
    %v1599 = vpop.permute.xlu0 %1598
    %v1601 = vadd.f32 %v1591, %v1599
    %v1602 = vtanh.pop %v1601
    %1604 = vrot.lane.b32.xlu0 %v1602, 64
    %v1605 = vpop.permute.xlu0 %1604
    %v1607 = vmul.f32 %v1586, %v1605
    %1609 = vrot.lane.b32.xlu0 %v1607, 32
    %v1610 = vpop.permute.xlu0 %1609
    %v1612 = vrot.slane %v1496, 4
    %1613 = vrot.lane.b32.xlu0 %v1612, 64
    %v1614 = vpop.permute.xlu0 %1613
    %v1616 = vsel %vm215, %v1610, %v1614
    %v1618 = vrot.slane %v1616, 4
    %v1619 = vsel %vm319, %v1618, 0
    %1621 = vmatprep.subr.mxu0 0.0
    %1622 = vmatpush1.msra.mxu0 0.0
    %1623 = vmatprep.subr.mxu0 0.0
    %1624 = vmatpush1.msra.mxu0 0.0
    %1625 = vmatprep.subr.mxu0 0.0
    %1626 = vmatpush1.msra.mxu0 0.0
    %1627 = vmatprep.subr.mxu0 0.0
    %1628 = vmatpush1.msra.mxu0 0.0
    %1629 = vmatprep.subr.mxu0 0.0
    %1630 = vmatpush1.msra.mxu0 0.0
    %1631 = vmatprep.subr.mxu0 0.0
    %1632 = vmatpush1.msra.mxu0 0.0
    %1633 = vmatprep.subr.mxu0 0.0
    %1634 = vmatpush1.msra.mxu0 0.0
    %1635 = vmatprep.subr.mxu0 0.0
    %1636 = vmatpush1.msra.mxu0 0.0
    %1637 = vmatprep.subr.mxu0 0.0
    %1638 = vmatpush1.msra.mxu0 %v111
    %1639 = vmatprep.subr.mxu0 0.0
    %1640 = vmatpush1.msra.mxu0 %v110
    %1641 = vmatprep.subr.mxu0 0.0
    %1642 = vmatpush1.msra.mxu0 %v109
    %1643 = vmatprep.subr.mxu0 0.0
    %1644 = vmatpush1.msra.mxu0 %v108
    %1645 = vmatprep.subr.mxu0 0.0
    %1646 = vmatpush1.msra.mxu0 %v107
    %1647 = vmatprep.subr.mxu0 0.0
    %1648 = vmatpush1.msra.mxu0 %v106
    %1649 = vmatprep.subr.mxu0 0.0
    %1650 = vmatpush1.msra.mxu0 %v105
    %1651 = vmatprep.subr.mxu0 0.0
    %1652 = vmatpush1.msra.mxu0 %v104
    %1653 = vmatprep.subr.mxu0 0.0
    %1654 = vmatpush2.msra.mxu0 0.0
    %1655 = vmatprep.subr.mxu0 0.0
    %1656 = vmatpush2.msra.mxu0 0.0
    %1657 = vmatprep.subr.mxu0 0.0
    %1658 = vmatpush2.msra.mxu0 0.0
    %1659 = vmatprep.subr.mxu0 0.0
    %1660 = vmatpush2.msra.mxu0 0.0
    %1661 = vmatprep.subr.mxu0 0.0
    %1662 = vmatpush2.msra.mxu0 0.0
    %1663 = vmatprep.subr.mxu0 0.0
    %1664 = vmatpush2.msra.mxu0 0.0
    %1665 = vmatprep.subr.mxu0 0.0
    %1666 = vmatpush2.msra.mxu0 0.0
    %1667 = vmatprep.subr.mxu0 0.0
    %1668 = vmatpush2.msra.mxu0 0.0
    %1669 = vmatprep.subr.mxu0 0.0
    %1670 = vmatpush2.msra.mxu0 0.0
    %1671 = vmatprep.subr.mxu0 0.0
    %1672 = vmatpush2.msra.mxu0 0.0
    %1673 = vmatprep.subr.mxu0 0.0
    %1674 = vmatpush2.msra.mxu0 0.0
    %1675 = vmatprep.subr.mxu0 0.0
    %1676 = vmatpush2.msra.mxu0 0.0
    %1677 = vmatprep.subr.mxu0 0.0
    %1678 = vmatpush2.msra.mxu0 0.0
    %1679 = vmatprep.subr.mxu0 0.0
    %1680 = vmatpush2.msra.mxu0 0.0
    %1681 = vmatprep.subr.mxu0 0.0
    %1682 = vmatpush2.msra.mxu0 0.0
    %1683 = vmatprep.subr.mxu0 0.0
    %1684 = vmatpush2.msra.mxu0 0.0
    %1685 = vmatprep.mubr.f32.mxu0 0.0
    %1686 = vmatmul.mubr.f32.gmra.mxu0 %v1619
    %v1687 = vpop.f32.mrf.mxu0
    %v1688 = vadd.f32 %v117, %v1687
    %v1689 = vpop.f32.mrf.mxu0
    %1690 = vdwg.mxu0
    %v1691 = vxor.u32 %v1688, 2147483648
    %v1692 = vmul.f32 %v1691, 1.442695
    %v1693 = vpow.pop %v1692
    %v1694 = vadd.f32 %v1693, 1.0
    %v1695 = vrcp.pop %v1694
    %v1696 = vmul.f32 1.0, %v1695
    %v1697 = vtanh.pop %v1688
    %v1698 = vmul.f32 %v1696, %v1490
    %1700 = vrot.lane.b32.xlu0 %v1697, 64
    %v1701 = vpop.permute.xlu0 %1700
    %v1703 = vmul.f32 %v1696, %v1701
    %1705 = vrot.lane.b32.xlu0 %v1703, 32
    %v1706 = vpop.permute.xlu0 %1705
    %v1708 = vadd.f32 %v1698, %v1706
    %v1709 = vtanh.pop %v1708
    %1711 = vrot.lane.b32.xlu0 %v1709, 64
    %v1712 = vpop.permute.xlu0 %1711
    %v1714 = vmul.f32 %v1696, %v1712
    %1716 = vrot.lane.b32.xlu0 %v1714, 32
    %v1717 = vpop.permute.xlu0 %1716
    %1719 = vst.msk [vmem:[#allocation2 + $0xc] sm:$0x3] %vm421, %v1717
    %v1720 = vrot.slane %v1607, 4
    %1721 = vrot.lane.b32.xlu0 %v1720, 32
    %v1722 = vpop.permute.xlu0 %1721
    %v1723 = vsel %vm215, %v1722, 0
    %1725 = vmatprep.subr.mxu0 0.0
    %1726 = vmatpush1.msra.mxu0 0.0
    %1727 = vmatprep.subr.mxu0 0.0
    %1728 = vmatpush1.msra.mxu0 0.0
    %1729 = vmatprep.subr.mxu0 0.0
    %1730 = vmatpush1.msra.mxu0 0.0
    %1731 = vmatprep.subr.mxu0 0.0
    %1732 = vmatpush1.msra.mxu0 0.0
    %1733 = vmatprep.subr.mxu0 0.0
    %1734 = vmatpush1.msra.mxu0 0.0
    %1735 = vmatprep.subr.mxu0 0.0
    %1736 = vmatpush1.msra.mxu0 0.0
    %1737 = vmatprep.subr.mxu0 0.0
    %1738 = vmatpush1.msra.mxu0 0.0
    %1739 = vmatprep.subr.mxu0 0.0
    %1740 = vmatpush1.msra.mxu0 0.0
    %1741 = vmatprep.subr.mxu0 0.0
    %1742 = vmatpush1.msra.mxu0 0.0
    %1743 = vmatprep.subr.mxu0 0.0
    %1744 = vmatpush1.msra.mxu0 0.0
    %1745 = vmatprep.subr.mxu0 0.0
    %1746 = vmatpush1.msra.mxu0 0.0
    %1747 = vmatprep.subr.mxu0 0.0
    %1748 = vmatpush1.msra.mxu0 0.0
    %1749 = vmatprep.subr.mxu0 0.0
    %1750 = vmatpush1.msra.mxu0 %v103
    %1751 = vmatprep.subr.mxu0 0.0
    %1752 = vmatpush1.msra.mxu0 %v102
    %1753 = vmatprep.subr.mxu0 0.0
    %1754 = vmatpush1.msra.mxu0 %v101
    %1755 = vmatprep.subr.mxu0 0.0
    %1756 = vmatpush1.msra.mxu0 %v100
    %1757 = vmatprep.subr.mxu0 0.0
    %1758 = vmatpush2.msra.mxu0 0.0
    %1759 = vmatprep.subr.mxu0 0.0
    %1760 = vmatpush2.msra.mxu0 0.0
    %1761 = vmatprep.subr.mxu0 0.0
    %1762 = vmatpush2.msra.mxu0 0.0
    %1763 = vmatprep.subr.mxu0 0.0
    %1764 = vmatpush2.msra.mxu0 0.0
    %1765 = vmatprep.subr.mxu0 0.0
    %1766 = vmatpush2.msra.mxu0 0.0
    %1767 = vmatprep.subr.mxu0 0.0
    %1768 = vmatpush2.msra.mxu0 0.0
    %1769 = vmatprep.subr.mxu0 0.0
    %1770 = vmatpush2.msra.mxu0 0.0
    %1771 = vmatprep.subr.mxu0 0.0
    %1772 = vmatpush2.msra.mxu0 0.0
    %1773 = vmatprep.subr.mxu0 0.0
    %1774 = vmatpush2.msra.mxu0 0.0
    %1775 = vmatprep.subr.mxu0 0.0
    %1776 = vmatpush2.msra.mxu0 0.0
    %1777 = vmatprep.subr.mxu0 0.0
    %1778 = vmatpush2.msra.mxu0 0.0
    %1779 = vmatprep.subr.mxu0 0.0
    %1780 = vmatpush2.msra.mxu0 0.0
    %1781 = vmatprep.subr.mxu0 0.0
    %1782 = vmatpush2.msra.mxu0 0.0
    %1783 = vmatprep.subr.mxu0 0.0
    %1784 = vmatpush2.msra.mxu0 0.0
    %1785 = vmatprep.subr.mxu0 0.0
    %1786 = vmatpush2.msra.mxu0 0.0
    %1787 = vmatprep.subr.mxu0 0.0
    %1788 = vmatpush2.msra.mxu0 0.0
    %1789 = vmatprep.mubr.f32.mxu0 0.0
    %1790 = vmatmul.mubr.f32.gmra.mxu0 %v1723
    %v1791 = vpop.f32.mrf.mxu0
    %v1792 = vadd.f32 0.0, %v1791
    %v1793 = vpop.f32.mrf.mxu0
    %1794 = vdwg.mxu0
    %v1796 = vrot.slane %v1792, 2
    %v1798 = vadd.f32 %v212, %v1796
    %v1799 = vxor.u32 %v1798, 2147483648
    %v1800 = vmul.f32 %v1799, 1.442695
    %v1801 = vpow.pop %v1800
    %v1802 = vadd.f32 %v1801, 1.0
    %v1803 = vrcp.pop %v1802
    %v1804 = vmul.f32 1.0, %v1803
    %v1805 = vtanh.pop %v1798
    %v1807 = vrot.slane %v1601, 6
    %v1809 = vmul.f32 %v1804, %v1807
    %1811 = vrot.lane.b32.xlu0 %v1805, 64
    %v1812 = vpop.permute.xlu0 %1811
    %v1814 = vmul.f32 %v1804, %v1812
    %1816 = vrot.lane.b32.xlu0 %v1814, 32
    %v1817 = vpop.permute.xlu0 %1816
    %v1819 = vadd.f32 %v1809, %v1817
    %v1820 = vtanh.pop %v1819
    %1822 = vrot.lane.b32.xlu0 %v1820, 64
    %v1823 = vpop.permute.xlu0 %1822
    %v1825 = vmul.f32 %v1804, %v1823
    %1827 = vrot.lane.b32.xlu0 %v1825, 32
    %v1828 = vpop.permute.xlu0 %1827
    %v1830 = vrot.slane %v1714, 2
    %1831 = vrot.lane.b32.xlu0 %v1830, 64
    %v1832 = vpop.permute.xlu0 %1831
    %v1834 = vsel %vm215, %v1828, %v1832
    %v1836 = vrot.slane %v1834, 6
    %v1837 = vsel %vm319, %v1836, 0
    %1839 = vmatprep.subr.mxu0 0.0
    %1840 = vmatpush1.msra.mxu0 0.0
    %1841 = vmatprep.subr.mxu0 0.0
    %1842 = vmatpush1.msra.mxu0 0.0
    %1843 = vmatprep.subr.mxu0 0.0
    %1844 = vmatpush1.msra.mxu0 0.0
    %1845 = vmatprep.subr.mxu0 0.0
    %1846 = vmatpush1.msra.mxu0 0.0
    %1847 = vmatprep.subr.mxu0 0.0
    %1848 = vmatpush1.msra.mxu0 0.0
    %1849 = vmatprep.subr.mxu0 0.0
    %1850 = vmatpush1.msra.mxu0 0.0
    %1851 = vmatprep.subr.mxu0 0.0
    %1852 = vmatpush1.msra.mxu0 0.0
    %1853 = vmatprep.subr.mxu0 0.0
    %1854 = vmatpush1.msra.mxu0 0.0
    %1855 = vmatprep.subr.mxu0 0.0
    %1856 = vmatpush1.msra.mxu0 %v111
    %1857 = vmatprep.subr.mxu0 0.0
    %1858 = vmatpush1.msra.mxu0 %v110
    %1859 = vmatprep.subr.mxu0 0.0
    %1860 = vmatpush1.msra.mxu0 %v109
    %1861 = vmatprep.subr.mxu0 0.0
    %1862 = vmatpush1.msra.mxu0 %v108
    %1863 = vmatprep.subr.mxu0 0.0
    %1864 = vmatpush1.msra.mxu0 %v107
    %1865 = vmatprep.subr.mxu0 0.0
    %1866 = vmatpush1.msra.mxu0 %v106
    %1867 = vmatprep.subr.mxu0 0.0
    %1868 = vmatpush1.msra.mxu0 %v105
    %1869 = vmatprep.subr.mxu0 0.0
    %1870 = vmatpush1.msra.mxu0 %v104
    %1871 = vmatprep.subr.mxu0 0.0
    %1872 = vmatpush2.msra.mxu0 0.0
    %1873 = vmatprep.subr.mxu0 0.0
    %1874 = vmatpush2.msra.mxu0 0.0
    %1875 = vmatprep.subr.mxu0 0.0
    %1876 = vmatpush2.msra.mxu0 0.0
    %1877 = vmatprep.subr.mxu0 0.0
    %1878 = vmatpush2.msra.mxu0 0.0
    %1879 = vmatprep.subr.mxu0 0.0
    %1880 = vmatpush2.msra.mxu0 0.0
    %1881 = vmatprep.subr.mxu0 0.0
    %1882 = vmatpush2.msra.mxu0 0.0
    %1883 = vmatprep.subr.mxu0 0.0
    %1884 = vmatpush2.msra.mxu0 0.0
    %1885 = vmatprep.subr.mxu0 0.0
    %1886 = vmatpush2.msra.mxu0 0.0
    %1887 = vmatprep.subr.mxu0 0.0
    %1888 = vmatpush2.msra.mxu0 0.0
    %1889 = vmatprep.subr.mxu0 0.0
    %1890 = vmatpush2.msra.mxu0 0.0
    %1891 = vmatprep.subr.mxu0 0.0
    %1892 = vmatpush2.msra.mxu0 0.0
    %1893 = vmatprep.subr.mxu0 0.0
    %1894 = vmatpush2.msra.mxu0 0.0
    %1895 = vmatprep.subr.mxu0 0.0
    %1896 = vmatpush2.msra.mxu0 0.0
    %1897 = vmatprep.subr.mxu0 0.0
    %1898 = vmatpush2.msra.mxu0 0.0
    %1899 = vmatprep.subr.mxu0 0.0
    %1900 = vmatpush2.msra.mxu0 0.0
    %1901 = vmatprep.subr.mxu0 0.0
    %1902 = vmatpush2.msra.mxu0 0.0
    %1903 = vmatprep.mubr.f32.mxu0 0.0
    %1904 = vmatmul.mubr.f32.gmra.mxu0 %v1837
    %v1905 = vpop.f32.mrf.mxu0
    %v1906 = vadd.f32 %v117, %v1905
    %v1907 = vpop.f32.mrf.mxu0
    %1908 = vdwg.mxu0
    %v1909 = vxor.u32 %v1906, 2147483648
    %v1910 = vmul.f32 %v1909, 1.442695
    %v1911 = vpow.pop %v1910
    %v1912 = vadd.f32 %v1911, 1.0
    %v1913 = vrcp.pop %v1912
    %v1914 = vmul.f32 1.0, %v1913
    %v1915 = vtanh.pop %v1906
    %v1916 = vmul.f32 %v1914, %v1708
    %1918 = vrot.lane.b32.xlu0 %v1915, 64
    %v1919 = vpop.permute.xlu0 %1918
    %v1921 = vmul.f32 %v1914, %v1919
    %1923 = vrot.lane.b32.xlu0 %v1921, 32
    %v1924 = vpop.permute.xlu0 %1923
    %v1926 = vadd.f32 %v1916, %v1924
    %v1927 = vtanh.pop %v1926
    %1929 = vrot.lane.b32.xlu0 %v1927, 64
    %v1930 = vpop.permute.xlu0 %1929
    %v1932 = vmul.f32 %v1914, %v1930
    %1934 = vrot.lane.b32.xlu0 %v1932, 32
    %v1935 = vpop.permute.xlu0 %1934
    %1937 = vst.msk [vmem:[#allocation2 + $0xe] sm:$0x3] %vm421, %v1935
    %v1938 = vld [vmem:[#allocation2] sm:$0xff]
    %v1939 = vld [vmem:[#allocation2 + $0x8] sm:$0xff]
    %v1940 = vld [vmem:[#allocation9] sm:$0xff]
    %v1941 = vld [vmem:[#allocation9 + $0x8] sm:$0xff]
    %v1942 = vld [vmem:[#allocation9 + $0x10] sm:$0xff]
    %v1943 = vld [vmem:[#allocation9 + $0x18] sm:$0xff]
    %v1944 = vld [vmem:[#allocation11] sm:$0x1]
    %v1946 = vlaneseq
    %v1947 = vshrl.u32 %v1946, 7
    %v1948 = vsub.s32 0, %v1947
    %v1949 = vrot.slane %v1944, %v1948
    %v1952 = vsel %vm215, %v1938, 0
    %v1955 = vsel %vm215, %v1939, 0
    %1957 = vmatprep.subr.mxu0 0.0
    %1958 = vmatpush1.msra.mxu0 0.0
    %1959 = vmatprep.subr.mxu0 0.0
    %1960 = vmatpush1.msra.mxu0 0.0
    %1961 = vmatprep.subr.mxu0 0.0
    %1962 = vmatpush1.msra.mxu0 0.0
    %1963 = vmatprep.subr.mxu0 0.0
    %1964 = vmatpush1.msra.mxu0 0.0
    %1965 = vmatprep.subr.mxu0 0.0
    %1966 = vmatpush1.msra.mxu0 0.0
    %1967 = vmatprep.subr.mxu0 0.0
    %1968 = vmatpush1.msra.mxu0 0.0
    %1969 = vmatprep.subr.mxu0 0.0
    %1970 = vmatpush1.msra.mxu0 0.0
    %1971 = vmatprep.subr.mxu0 0.0
    %1972 = vmatpush1.msra.mxu0 0.0
    %1973 = vmatprep.subr.mxu0 0.0
    %1974 = vmatpush1.msra.mxu0 0.0
    %1975 = vmatprep.subr.mxu0 0.0
    %1976 = vmatpush1.msra.mxu0 0.0
    %1977 = vmatprep.subr.mxu0 0.0
    %1978 = vmatpush1.msra.mxu0 0.0
    %1979 = vmatprep.subr.mxu0 0.0
    %1980 = vmatpush1.msra.mxu0 0.0
    %1981 = vmatprep.subr.mxu0 0.0
    %1982 = vmatpush1.msra.mxu0 %v1943
    %1983 = vmatprep.subr.mxu0 0.0
    %1984 = vmatpush1.msra.mxu0 %v1942
    %1985 = vmatprep.subr.mxu0 0.0
    %1986 = vmatpush1.msra.mxu0 %v1941
    %1987 = vmatprep.subr.mxu0 0.0
    %1988 = vmatpush1.msra.mxu0 %v1940
    %1989 = vmatprep.subr.mxu0 0.0
    %1990 = vmatpush2.msra.mxu0 0.0
    %1991 = vmatprep.subr.mxu0 0.0
    %1992 = vmatpush2.msra.mxu0 0.0
    %1993 = vmatprep.subr.mxu0 0.0
    %1994 = vmatpush2.msra.mxu0 0.0
    %1995 = vmatprep.subr.mxu0 0.0
    %1996 = vmatpush2.msra.mxu0 0.0
    %1997 = vmatprep.subr.mxu0 0.0
    %1998 = vmatpush2.msra.mxu0 0.0
    %1999 = vmatprep.subr.mxu0 0.0
    %2000 = vmatpush2.msra.mxu0 0.0
    %2001 = vmatprep.subr.mxu0 0.0
    %2002 = vmatpush2.msra.mxu0 0.0
    %2003 = vmatprep.subr.mxu0 0.0
    %2004 = vmatpush2.msra.mxu0 0.0
    %2005 = vmatprep.subr.mxu0 0.0
    %2006 = vmatpush2.msra.mxu0 0.0
    %2007 = vmatprep.subr.mxu0 0.0
    %2008 = vmatpush2.msra.mxu0 0.0
    %2009 = vmatprep.subr.mxu0 0.0
    %2010 = vmatpush2.msra.mxu0 0.0
    %2011 = vmatprep.subr.mxu0 0.0
    %2012 = vmatpush2.msra.mxu0 0.0
    %2013 = vmatprep.subr.mxu0 0.0
    %2014 = vmatpush2.msra.mxu0 0.0
    %2015 = vmatprep.subr.mxu0 0.0
    %2016 = vmatpush2.msra.mxu0 0.0
    %2017 = vmatprep.subr.mxu0 0.0
    %2018 = vmatpush2.msra.mxu0 0.0
    %2019 = vmatprep.subr.mxu0 0.0
    %2020 = vmatpush2.msra.mxu0 0.0
    %2021 = vmatprep.mubr.f32.mxu0 0.0
    %2022 = vmatmul.mubr.f32.gmra.mxu0 %v1952
    %v2023 = vpop.f32.mrf.mxu0
    %v2024 = vadd.f32 %v1949, %v2023
    %v2025 = vpop.f32.mrf.mxu0
    %2026 = vmatprep.mubr.f32.mxu0 0.0
    %2027 = vmatmul.mubr.f32.gmra.mxu0 %v1955
    %v2028 = vpop.f32.mrf.mxu0
    %v2029 = vadd.f32 %v1949, %v2028
    %v2030 = vpop.f32.mrf.mxu0
    %2031 = vdwg.mxu0
    %v2032 = vxor.u32 %v2024, 2147483648
    %v2033 = vxor.u32 %v2029, 2147483648
    %v2034 = vmul.f32 %v2032, 1.442695
    %v2035 = vpow.pop %v2034
    %v2036 = vmul.f32 %v2033, 1.442695
    %v2037 = vpow.pop %v2036
    %v2038 = vadd.f32 %v2035, 1.0
    %v2039 = vadd.f32 %v2037, 1.0
    %v2040 = vrcp.pop %v2038
    %v2041 = vmul.f32 1.0, %v2040
    %v2042 = vrcp.pop %v2039
    %v2043 = vmul.f32 1.0, %v2042
    %v2044 = vmul.f32 %v2024, %v2041
    %v2045 = vmul.f32 %v2029, %v2043
    %v2046 = vld [vmem:[%s8] sm:$0xff]
    %v2047 = vld [vmem:[%s8 + $0x8] sm:$0xff]
    %v2048 = vld [vmem:[%s8 + $0x10] sm:$0xff]
    %v2049 = vld [vmem:[%s8 + $0x18] sm:$0xff]
    %v2050 = vld [vmem:[%s9] sm:$0x1]
    %v2052 = vlaneseq
    %v2053 = vshrl.u32 %v2052, 7
    %v2054 = vsub.s32 0, %v2053
    %v2055 = vrot.slane %v2050, %v2054
    %v2058 = vsel %vm215, %v2044, 0
    %v2061 = vsel %vm215, %v2045, 0
    %2063 = vmatprep.subr.mxu0 0.0
    %2064 = vmatpush1.msra.mxu0 0.0
    %2065 = vmatprep.subr.mxu0 0.0
    %2066 = vmatpush1.msra.mxu0 0.0
    %2067 = vmatprep.subr.mxu0 0.0
    %2068 = vmatpush1.msra.mxu0 0.0
    %2069 = vmatprep.subr.mxu0 0.0
    %2070 = vmatpush1.msra.mxu0 0.0
    %2071 = vmatprep.subr.mxu0 0.0
    %2072 = vmatpush1.msra.mxu0 0.0
    %2073 = vmatprep.subr.mxu0 0.0
    %2074 = vmatpush1.msra.mxu0 0.0
    %2075 = vmatprep.subr.mxu0 0.0
    %2076 = vmatpush1.msra.mxu0 0.0
    %2077 = vmatprep.subr.mxu0 0.0
    %2078 = vmatpush1.msra.mxu0 0.0
    %2079 = vmatprep.subr.mxu0 0.0
    %2080 = vmatpush1.msra.mxu0 0.0
    %2081 = vmatprep.subr.mxu0 0.0
    %2082 = vmatpush1.msra.mxu0 0.0
    %2083 = vmatprep.subr.mxu0 0.0
    %2084 = vmatpush1.msra.mxu0 0.0
    %2085 = vmatprep.subr.mxu0 0.0
    %2086 = vmatpush1.msra.mxu0 0.0
    %2087 = vmatprep.subr.mxu0 0.0
    %2088 = vmatpush1.msra.mxu0 %v2049
    %2089 = vmatprep.subr.mxu0 0.0
    %2090 = vmatpush1.msra.mxu0 %v2048
    %2091 = vmatprep.subr.mxu0 0.0
    %2092 = vmatpush1.msra.mxu0 %v2047
    %2093 = vmatprep.subr.mxu0 0.0
    %2094 = vmatpush1.msra.mxu0 %v2046
    %2095 = vmatprep.subr.mxu0 0.0
    %2096 = vmatpush2.msra.mxu0 0.0
    %2097 = vmatprep.subr.mxu0 0.0
    %2098 = vmatpush2.msra.mxu0 0.0
    %2099 = vmatprep.subr.mxu0 0.0
    %2100 = vmatpush2.msra.mxu0 0.0
    %2101 = vmatprep.subr.mxu0 0.0
    %2102 = vmatpush2.msra.mxu0 0.0
    %2103 = vmatprep.subr.mxu0 0.0
    %2104 = vmatpush2.msra.mxu0 0.0
    %2105 = vmatprep.subr.mxu0 0.0
    %2106 = vmatpush2.msra.mxu0 0.0
    %2107 = vmatprep.subr.mxu0 0.0
    %2108 = vmatpush2.msra.mxu0 0.0
    %2109 = vmatprep.subr.mxu0 0.0
    %2110 = vmatpush2.msra.mxu0 0.0
    %2111 = vmatprep.subr.mxu0 0.0
    %2112 = vmatpush2.msra.mxu0 0.0
    %2113 = vmatprep.subr.mxu0 0.0
    %2114 = vmatpush2.msra.mxu0 0.0
    %2115 = vmatprep.subr.mxu0 0.0
    %2116 = vmatpush2.msra.mxu0 0.0
    %2117 = vmatprep.subr.mxu0 0.0
    %2118 = vmatpush2.msra.mxu0 0.0
    %2119 = vmatprep.subr.mxu0 0.0
    %2120 = vmatpush2.msra.mxu0 0.0
    %2121 = vmatprep.subr.mxu0 0.0
    %2122 = vmatpush2.msra.mxu0 0.0
    %2123 = vmatprep.subr.mxu0 0.0
    %2124 = vmatpush2.msra.mxu0 0.0
    %2125 = vmatprep.subr.mxu0 0.0
    %2126 = vmatpush2.msra.mxu0 0.0
    %2127 = vmatprep.mubr.f32.mxu0 0.0
    %2128 = vmatmul.mubr.f32.gmra.mxu0 %v2058
    %v2129 = vpop.f32.mrf.mxu0
    %v2130 = vadd.f32 %v2055, %v2129
    %v2131 = vpop.f32.mrf.mxu0
    %2132 = vmatprep.mubr.f32.mxu0 0.0
    %2133 = vmatmul.mubr.f32.gmra.mxu0 %v2061
    %v2134 = vpop.f32.mrf.mxu0
    %v2135 = vadd.f32 %v2055, %v2134
    %v2136 = vpop.f32.mrf.mxu0
    %2137 = vdwg.mxu0
    %2138 = vst [vmem:[#allocation12] sm:$0xff] %v2130
    %2139 = vst [vmem:[#allocation12 + $0x8] sm:$0xff] %v2135
    // Predicated region
    $region62: #{tpu_custom_call.1} parent=1 // pred_check
      _
    $region63: #{tpu_custom_call.1} parent=1 // pred_check_branch
      %2141 = sbr.rel (0) target = $region65
    $region64: #{tpu_custom_call.1} parent=1 // pred_region
      %s2143 = ssub.s32 256, 256
      %2144 = vsyncadd [#allocation5], %s2143
      %s2145 = sshll.u32 [#allocation12], 4
      %s2146 = int_to_ptr.vmem [resolvable:$true] %s2145
      %2151 = dma.vmem_to_hbm [thread:$0]  %s2146, 256, %s10, [#allocation5], 128, 128, 8
    $region65: #{tpu_custom_call.1} parent=1 // pred_fallthru
      _
    // Predicated region
    $region66: #{tpu_custom_call.1} parent=1 // pred_check
      _
    $region67: #{tpu_custom_call.1} parent=1 // pred_check_branch
      %2153 = sbr.rel (0) target = $region69
    $region68: #{tpu_custom_call.1} parent=1 // pred_region
      %2154 = dma.done [#allocation5], 256
    $region69: #{tpu_custom_call.1} parent=1 // pred_fallthru
      _
    %2155 = vsyncpa [#allocation4], 1
    %2156 = vsyncpa [#allocation7], 1
    %2157 = vsyncpa [#allocation10], 1
    %2158 = vsyncpa [#allocation5], 1

</llo_original>
